<compile_context>
chip_gen: v6e
topology: v6e:2x2x1
jax: 0.10.0
libtpu: 0.0.40
codegen_flags: <defaults>
</compile_context>

<pallas_src>
import jax
import jax.numpy as jnp
from jax import lax
from jax.experimental import pallas as pl
from jax.experimental.pallas import tpu as pltpu

C = 16            # channels fixed by the module (Conv2d(16, 16, ...))
KH = KW = 3
K_TAPS = KH * KW  # 9
HALO = 2          # halo rows above/below each row-block (2 chained 3x3 convs)


def _pick_tile_rows(h, w):
    """Pick row-block height TH: divides H, TH*W multiple of 128 (lane-dense
    aligned output stores), TH*W near ~1024 lanes for good vreg/halo balance."""
    target = max(128, min(1024, (h * w) // 2))
    cands = [t for t in range(1, h + 1)
             if h % t == 0 and ((t * w) % 128 == 0 or t == h)]
    return min(cands, key=lambda t: (abs(t * w - target), -t))


def _make_kernel(tile_rows, width, compute_dtype):
    pe = (tile_rows + 2 * HALO) * width   # flattened extended-tile length
    out_lo = HALO * width                 # first real (non-halo) position
    out_len = tile_rows * width

    # (lane-roll shift, column-mask row) per 3x3 tap in (kh, kw) row-major order
    # (must match the wrapper's (O, kh, kw, I) -> (O, 144) weight reshape).
    taps = []
    for kh in range(KH):
        for kw in range(KW):
            dy, dx = kh - 1, kw - 1
            shift = (-(dy * width + dx)) % pe
            mrow = {-1: 0, 0: -1, 1: 1}[dx]
            taps.append((shift, mrow))

    def stack_taps(act, cmask, s_ref):
        # Write the 9 shifted + edge-masked taps of `act` into scratch rows
        # [k*C, (k+1)*C).  Vertical neighbours come from the halo rows; the
        # column masks zero the taps that wrapped across an image row.
        for k, (shift, mrow) in enumerate(taps):
            t = act if shift == 0 else pltpu.roll(act, shift=shift, axis=1)
            if mrow >= 0:
                t = t * cmask[mrow:mrow + 1, :]
            s_ref[k * C:(k + 1) * C, :] = t

    def kernel(x_ref, w1_ref, w2_ref, cmask_ref, rmask_ref,
               b1x2_ref, b1dbl_ref, b2_ref, out_ref, s1_ref, s2_ref):
        xw = x_ref[0, 0]            # (C, PE) haloed input tile, compute dtype
        cmask = cmask_ref[...]      # (2, PE) column-edge masks

        # conv1 as a single K=144 MXU matmul over the stacked taps.
        stack_taps(xw, cmask, s1_ref)
        acc1 = jnp.dot(w1_ref[...], s1_ref[...],
                       preferred_element_type=jnp.float32)       # (C, PE) f32

        # v3 = relu(x2 + conv1(x1) + b1); x2 folded into the bias.  Row mask
        # zeroes the image's zero-padding rows so conv2 sees 'same' padding.
        v3 = jnp.maximum(acc1 + b1x2_ref[...], 0.0) * rmask_ref[0]

        # conv2 (same weights) on v3, again one K=144 matmul.
        stack_taps(v3.astype(compute_dtype), cmask, s2_ref)
        acc2 = jnp.dot(w1_ref[...], s2_ref[...],
                       preferred_element_type=jnp.float32)       # (C, PE) f32

        # v6 = relu(conv1(v3) + v1) = relu(acc2 + acc1 + 2*b1) on the real rows.
        sl = slice(out_lo, out_lo + out_len)
        v6 = jnp.maximum(acc1[:, sl] + acc2[:, sl] + b1dbl_ref[...], 0.0)

        # v7 = 1x1 conv (+ bias).
        out_ref[0] = (jnp.dot(w2_ref[...], v6.astype(compute_dtype),
                              preferred_element_type=jnp.float32)
                      + b2_ref[...])

    return kernel


def model_forward(x1_nchw, x2_scalar, w1, b1, w2, b2, *,
                  compute_dtype=jnp.bfloat16, tile_rows=None):
    """x1: (N,16,H,W) f32. w1: (16,16,3,3) OIHW. b1: (16,). w2: (16,16) [out,in]. b2: (16,)."""
    n, c, h, w = x1_nchw.shape
    assert c == C
    th = tile_rows if tile_rows is not None else _pick_tile_rows(h, w)
    assert h % th == 0 and ((th * w) % 128 == 0 or th == h)
    n_rb = h // th
    pe = (th + 2 * HALO) * w
    cd = compute_dtype

    # Zero-pad 2 rows top/bottom (implicit 'same' padding + vertical halo),
    # then materialize non-overlapping haloed row-block windows so the input
    # BlockSpec stays plain Blocked.
    xp = jnp.pad(x1_nchw.astype(jnp.float32),
                 ((0, 0), (0, 0), (HALO, HALO), (0, 0)))
    x_tiles = jnp.stack(
        [lax.slice_in_dim(xp, r * th, r * th + th + 2 * HALO, axis=2)
         for r in range(n_rb)], axis=1).reshape(n, n_rb, C, pe).astype(cd)

    # conv1 weight as (C_out, 9*C_in); column block k = kh*3+kw holds w1[:,:,kh,kw].
    w1s = jnp.transpose(w1, (0, 2, 3, 1)).reshape(C, K_TAPS * C).astype(cd)
    w2m = w2.astype(cd)

    # Column-edge masks for the horizontally shifted taps (precomputed; no
    # in-kernel iota/div/mod): row 0 -> dx=-1 (zero at col 0), row 1 -> dx=+1.
    col = jnp.arange(pe, dtype=jnp.int32) % w
    cmask = jnp.stack([col >= 1, col <= w - 2]).astype(cd)            # (2, PE)

    # Per-row-block validity of the extended rows (0 at the zero-padding rows).
    erow = jnp.arange(pe, dtype=jnp.int32) // w
    prow = jnp.arange(n_rb, dtype=jnp.int32)[:, None] * th + erow[None, :]
    rmask = ((prow >= HALO) & (prow < h + HALO)
             ).astype(jnp.float32)[:, None, :]                        # (n_rb,1,PE)

    x2f = jnp.asarray(x2_scalar, dtype=jnp.float32)
    b1x2 = (b1.astype(jnp.float32) + x2f).reshape(C, 1)               # bias for v3
    b1dbl = (2.0 * b1.astype(jnp.float32)).reshape(C, 1)              # bias for v6
    b2c = b2.astype(jnp.float32).reshape(C, 1)

    kernel = _make_kernel(th, w, cd)
    out_flat = pl.pallas_call(
        kernel,
        grid=(n, n_rb),
        in_specs=[
            pl.BlockSpec((1, 1, C, pe), lambda i, r: (i, r, 0, 0)),   # haloed tile
            pl.BlockSpec((C, K_TAPS * C), lambda i, r: (0, 0)),       # w1 stacked
            pl.BlockSpec((C, C), lambda i, r: (0, 0)),                # w2 (1x1)
            pl.BlockSpec((2, pe), lambda i, r: (0, 0)),               # col masks
            pl.BlockSpec((1, 1, pe), lambda i, r: (r, 0, 0)),         # row mask
            pl.BlockSpec((C, 1), lambda i, r: (0, 0)),                # b1 + x2
            pl.BlockSpec((C, 1), lambda i, r: (0, 0)),                # 2*b1
            pl.BlockSpec((C, 1), lambda i, r: (0, 0)),                # b2
        ],
        out_specs=pl.BlockSpec((1, C, th * w), lambda i, r: (i, 0, r)),
        out_shape=jax.ShapeDtypeStruct((n, C, h * w), jnp.float32),
        scratch_shapes=[pltpu.VMEM((K_TAPS * C, pe), cd),
                        pltpu.VMEM((K_TAPS * C, pe), cd)],
        compiler_params=pltpu.CompilerParams(
            dimension_semantics=("parallel", "parallel")),
    )(x_tiles, w1s, w2m, cmask, rmask, b1x2, b1dbl, b2c)

    return out_flat.reshape(n, C, h, w)


def reference_forward(x1, x2, w1, b1, w2, b2):
    """Pure-JAX (XLA conv) reference for correctness checking, all in NCHW."""
    dn = ('NCHW', 'OIHW', 'NCHW')

    def conv3(z):
        return lax.conv_general_dilated(z, w1, (1, 1), 'SAME',
                                        dimension_numbers=dn) + b1[None, :, None, None]

    v1 = conv3(x1)
    v3 = jnp.maximum(x2 + v1, 0.0)
    v4 = conv3(v3)
    v6 = jnp.maximum(v4 + v1, 0.0)
    v7 = lax.conv_general_dilated(v6, w2[:, :, None, None], (1, 1), 'VALID',
                                  dimension_numbers=dn) + b2[None, :, None, None]
    return v7


if __name__ == "__main__":
    key = jax.random.PRNGKey(0)
    k_x, k_w1, k_b1, k_w2, k_b2 = jax.random.split(key, 5)

    # Small stand-in for the module's (1, 16, 64, 64); semantics identical.
    N, H, W = 2, 32, 32
    x1 = jax.random.normal(k_x, (N, C, H, W), dtype=jnp.float32)   # NCHW input
    x2 = 1.0                                                       # scalar operand

    # Deterministic parameters (shapes dictated by the module's convs, OIHW).
    w1 = jax.random.normal(k_w1, (C, C, KH, KW), dtype=jnp.float32) / (KH * KW * C) ** 0.5
    b1 = jax.random.normal(k_b1, (C,), dtype=jnp.float32) * 0.1
    w2 = jax.random.normal(k_w2, (C, C), dtype=jnp.float32) / C ** 0.5
    b2 = jax.random.normal(k_b2, (C,), dtype=jnp.float32) * 0.1

    ref = jax.block_until_ready(reference_forward(x1, x2, w1, b1, w2, b2))
    ref_max = float(jnp.max(jnp.abs(ref)))

    fwd = jax.jit(model_forward, static_argnames=("compute_dtype", "tile_rows"))

    # f32-operand path, forced 4 row-blocks (exercises interior + boundary halos).
    out_f32 = jax.block_until_ready(
        fwd(x1, x2, w1, b1, w2, b2, compute_dtype=jnp.float32, tile_rows=8))
    assert out_f32.shape == (N, C, H, W), out_f32.shape
    err_f32 = float(jnp.max(jnp.abs(out_f32 - ref)))
    assert err_f32 < 1e-3, f"f32 max abs error {err_f32}"

    # bf16 MXU-operand path (production setting on v6e/v7x), default tiling.
    out_bf16 = jax.block_until_ready(
        fwd(x1, x2, w1, b1, w2, b2, compute_dtype=jnp.bfloat16))
    err_bf16 = float(jnp.max(jnp.abs(out_bf16 - ref)))
    assert err_bf16 < 3e-2 * max(1.0, ref_max), f"bf16 max abs error {err_bf16}"

    print("KERNEL_OK")
</pallas_src>

<mosaic_0001>
module attributes {stable_mosaic.version = 11 : i64} {
  func.func @kernel(%arg0: i32, %arg1: i32, %arg2: memref<1x1x16x384xf32, #tpu.memory_space<vmem>>, %arg3: memref<16x144xf32, #tpu.memory_space<vmem>>, %arg4: memref<16x16xf32, #tpu.memory_space<vmem>>, %arg5: memref<2x384xf32, #tpu.memory_space<vmem>>, %arg6: memref<1x1x384xf32, #tpu.memory_space<vmem>>, %arg7: memref<16x1xf32, #tpu.memory_space<vmem>>, %arg8: memref<16x1xf32, #tpu.memory_space<vmem>>, %arg9: memref<16x1xf32, #tpu.memory_space<vmem>>, %arg10: memref<1x16x256xf32, #tpu.memory_space<vmem>>, %arg11: memref<144x384xf32, #tpu.memory_space<vmem>>, %arg12: memref<144x384xf32, #tpu.memory_space<vmem>>) attributes {dimension_semantics = [#tpu.dimension_semantics<parallel>, #tpu.dimension_semantics<parallel>], iteration_bounds = array<i64: 2, 4>, scalar_prefetch = 0 : i64, scratch_operands = 2 : i64, tpu.core_type = #tpu.core_type<tc>, window_params = [{transform_indices = @transform_0, window_bounds = array<i64: 1, 1, 16, 384>}, {pipeline_mode = #tpu.pipeline_mode<synchronous>, transform_indices = @transform_1, window_bounds = array<i64: 16, 144>}, {pipeline_mode = #tpu.pipeline_mode<synchronous>, transform_indices = @transform_2, window_bounds = array<i64: 16, 16>}, {pipeline_mode = #tpu.pipeline_mode<synchronous>, transform_indices = @transform_3, window_bounds = array<i64: 2, 384>}, {transform_indices = @transform_4, window_bounds = array<i64: 1, 1, 384>}, {pipeline_mode = #tpu.pipeline_mode<synchronous>, transform_indices = @transform_5, window_bounds = array<i64: 16, 1>}, {pipeline_mode = #tpu.pipeline_mode<synchronous>, transform_indices = @transform_6, window_bounds = array<i64: 16, 1>}, {pipeline_mode = #tpu.pipeline_mode<synchronous>, transform_indices = @transform_7, window_bounds = array<i64: 16, 1>}, {transform_indices = @transform_8, window_bounds = array<i64: 1, 16, 256>}]} {
    %c0 = arith.constant 0 : index
    %c0_0 = arith.constant 0 : index
    %c0_1 = arith.constant 0 : index
    %c0_2 = arith.constant 0 : index
    %0 = vector.load %arg2[%c0, %c0_0, %c0_1, %c0_2] : memref<1x1x16x384xf32, #tpu.memory_space<vmem>>, vector<1x1x16x384xf32>
    %1 = vector.shape_cast %0 : vector<1x1x16x384xf32> to vector<16x384xf32>
    %c0_3 = arith.constant 0 : index
    %c0_4 = arith.constant 0 : index
    %2 = vector.load %arg5[%c0_3, %c0_4] : memref<2x384xf32, #tpu.memory_space<vmem>>, vector<2x384xf32>
    %c33_i32 = arith.constant 33 : i32
    %3 = tpu.dynamic_rotate %1 by %c33_i32 dim 1 : vector<16x384xf32>, i32 -> vector<16x384xf32>
    %4 = vector.extract_strided_slice %2 {offsets = [0, 0], sizes = [1, 384], strides = [1, 1]} : vector<2x384xf32> to vector<1x384xf32>
    %5 = vector.broadcast %4 : vector<1x384xf32> to vector<16x384xf32>
    %6 = arith.mulf %3, %5 : vector<16x384xf32>
    %c0_5 = arith.constant 0 : index
    %c0_6 = arith.constant 0 : index
    %7 = vector.load %arg11[%c0_5, %c0_6] : memref<144x384xf32, #tpu.memory_space<vmem>>, vector<16x384xf32>
    tpu.vector_store %arg11[%c0_5, %c0_6], %6 {strides = array<i32>} : memref<144x384xf32, #tpu.memory_space<vmem>>, vector<16x384xf32>,
    %c32_i32 = arith.constant 32 : i32
    %8 = tpu.dynamic_rotate %1 by %c32_i32 dim 1 : vector<16x384xf32>, i32 -> vector<16x384xf32>
    %c16 = arith.constant 16 : index
    %c0_7 = arith.constant 0 : index
    %9 = vector.load %arg11[%c16, %c0_7] : memref<144x384xf32, #tpu.memory_space<vmem>>, vector<16x384xf32>
    tpu.vector_store %arg11[%c16, %c0_7], %8 {strides = array<i32>} : memref<144x384xf32, #tpu.memory_space<vmem>>, vector<16x384xf32>,
    %c31_i32 = arith.constant 31 : i32
    %10 = tpu.dynamic_rotate %1 by %c31_i32 dim 1 : vector<16x384xf32>, i32 -> vector<16x384xf32>
    %11 = vector.extract_strided_slice %2 {offsets = [1, 0], sizes = [1, 384], strides = [1, 1]} : vector<2x384xf32> to vector<1x384xf32>
    %12 = vector.broadcast %11 : vector<1x384xf32> to vector<16x384xf32>
    %13 = arith.mulf %10, %12 : vector<16x384xf32>
    %c32 = arith.constant 32 : index
    %c0_8 = arith.constant 0 : index
    %14 = vector.load %arg11[%c32, %c0_8] : memref<144x384xf32, #tpu.memory_space<vmem>>, vector<16x384xf32>
    tpu.vector_store %arg11[%c32, %c0_8], %13 {strides = array<i32>} : memref<144x384xf32, #tpu.memory_space<vmem>>, vector<16x384xf32>,
    %c1_i32 = arith.constant 1 : i32
    %15 = tpu.dynamic_rotate %1 by %c1_i32 dim 1 : vector<16x384xf32>, i32 -> vector<16x384xf32>
    %16 = vector.extract_strided_slice %2 {offsets = [0, 0], sizes = [1, 384], strides = [1, 1]} : vector<2x384xf32> to vector<1x384xf32>
    %17 = vector.broadcast %16 : vector<1x384xf32> to vector<16x384xf32>
    %18 = arith.mulf %15, %17 : vector<16x384xf32>
    %c48 = arith.constant 48 : index
    %c0_9 = arith.constant 0 : index
    %19 = vector.load %arg11[%c48, %c0_9] : memref<144x384xf32, #tpu.memory_space<vmem>>, vector<16x384xf32>
    tpu.vector_store %arg11[%c48, %c0_9], %18 {strides = array<i32>} : memref<144x384xf32, #tpu.memory_space<vmem>>, vector<16x384xf32>,
    %c64 = arith.constant 64 : index
    %c0_10 = arith.constant 0 : index
    %20 = vector.load %arg11[%c64, %c0_10] : memref<144x384xf32, #tpu.memory_space<vmem>>, vector<16x384xf32>
    tpu.vector_store %arg11[%c64, %c0_10], %1 {strides = array<i32>} : memref<144x384xf32, #tpu.memory_space<vmem>>, vector<16x384xf32>,
    %c383_i32 = arith.constant 383 : i32
    %21 = tpu.dynamic_rotate %1 by %c383_i32 dim 1 : vector<16x384xf32>, i32 -> vector<16x384xf32>
    %22 = vector.extract_strided_slice %2 {offsets = [1, 0], sizes = [1, 384], strides = [1, 1]} : vector<2x384xf32> to vector<1x384xf32>
    %23 = vector.broadcast %22 : vector<1x384xf32> to vector<16x384xf32>
    %24 = arith.mulf %21, %23 : vector<16x384xf32>
    %c80 = arith.constant 80 : index
    %c0_11 = arith.constant 0 : index
    %25 = vector.load %arg11[%c80, %c0_11] : memref<144x384xf32, #tpu.memory_space<vmem>>, vector<16x384xf32>
    tpu.vector_store %arg11[%c80, %c0_11], %24 {strides = array<i32>} : memref<144x384xf32, #tpu.memory_space<vmem>>, vector<16x384xf32>,
    %c353_i32 = arith.constant 353 : i32
    %26 = tpu.dynamic_rotate %1 by %c353_i32 dim 1 : vector<16x384xf32>, i32 -> vector<16x384xf32>
    %27 = vector.extract_strided_slice %2 {offsets = [0, 0], sizes = [1, 384], strides = [1, 1]} : vector<2x384xf32> to vector<1x384xf32>
    %28 = vector.broadcast %27 : vector<1x384xf32> to vector<16x384xf32>
    %29 = arith.mulf %26, %28 : vector<16x384xf32>
    %c96 = arith.constant 96 : index
    %c0_12 = arith.constant 0 : index
    %30 = vector.load %arg11[%c96, %c0_12] : memref<144x384xf32, #tpu.memory_space<vmem>>, vector<16x384xf32>
    tpu.vector_store %arg11[%c96, %c0_12], %29 {strides = array<i32>} : memref<144x384xf32, #tpu.memory_space<vmem>>, vector<16x384xf32>,
    %c352_i32 = arith.constant 352 : i32
    %31 = tpu.dynamic_rotate %1 by %c352_i32 dim 1 : vector<16x384xf32>, i32 -> vector<16x384xf32>
    %c112 = arith.constant 112 : index
    %c0_13 = arith.constant 0 : index
    %32 = vector.load %arg11[%c112, %c0_13] : memref<144x384xf32, #tpu.memory_space<vmem>>, vector<16x384xf32>
    tpu.vector_store %arg11[%c112, %c0_13], %31 {strides = array<i32>} : memref<144x384xf32, #tpu.memory_space<vmem>>, vector<16x384xf32>,
    %c351_i32 = arith.constant 351 : i32
    %33 = tpu.dynamic_rotate %1 by %c351_i32 dim 1 : vector<16x384xf32>, i32 -> vector<16x384xf32>
    %34 = vector.extract_strided_slice %2 {offsets = [1, 0], sizes = [1, 384], strides = [1, 1]} : vector<2x384xf32> to vector<1x384xf32>
    %35 = vector.broadcast %34 : vector<1x384xf32> to vector<16x384xf32>
    %36 = arith.mulf %33, %35 : vector<16x384xf32>
    %c128 = arith.constant 128 : index
    %c0_14 = arith.constant 0 : index
    %37 = vector.load %arg11[%c128, %c0_14] : memref<144x384xf32, #tpu.memory_space<vmem>>, vector<16x384xf32>
    tpu.vector_store %arg11[%c128, %c0_14], %36 {strides = array<i32>} : memref<144x384xf32, #tpu.memory_space<vmem>>, vector<16x384xf32>,
    %c0_15 = arith.constant 0 : index
    %c0_16 = arith.constant 0 : index
    %38 = vector.load %arg3[%c0_15, %c0_16] : memref<16x144xf32, #tpu.memory_space<vmem>>, vector<16x144xf32>
    %c0_17 = arith.constant 0 : index
    %c0_18 = arith.constant 0 : index
    %39 = vector.load %arg11[%c0_17, %c0_18] : memref<144x384xf32, #tpu.memory_space<vmem>>, vector<144x384xf32>
    %cst = arith.constant dense<0.000000e+00> : vector<16x384xf32>
    %40 = tpu.matmul %38, %39, %cst {dimension_numbers = #tpu.dot_dimension_numbers<[1], [0], [0], [1], [0, 0, 1, 1], [], []>} : vector<16x144xf32>, vector<144x384xf32>, vector<16x384xf32> -> vector<16x384xf32>
    %c0_19 = arith.constant 0 : index
    %c0_20 = arith.constant 0 : index
    %41 = vector.load %arg7[%c0_19, %c0_20] : memref<16x1xf32, #tpu.memory_space<vmem>>, vector<16x1xf32>
    %42 = vector.broadcast %41 : vector<16x1xf32> to vector<16x384xf32>
    %43 = arith.addf %40, %42 : vector<16x384xf32>
    %cst_21 = arith.constant 0.000000e+00 : f32
    %44 = vector.broadcast %cst_21 : f32 to vector<16x384xf32>
    %45 = arith.maximumf %43, %44 : vector<16x384xf32>
    %c0_22 = arith.constant 0 : index
    %c0_23 = arith.constant 0 : index
    %c0_24 = arith.constant 0 : index
    %46 = vector.load %arg6[%c0_22, %c0_23, %c0_24] : memref<1x1x384xf32, #tpu.memory_space<vmem>>, vector<1x1x384xf32>
    %47 = vector.shape_cast %46 : vector<1x1x384xf32> to vector<1x384xf32>
    %48 = vector.broadcast %47 : vector<1x384xf32> to vector<16x384xf32>
    %49 = arith.mulf %45, %48 : vector<16x384xf32>
    %c33_i32_25 = arith.constant 33 : i32
    %50 = tpu.dynamic_rotate %49 by %c33_i32_25 dim 1 : vector<16x384xf32>, i32 -> vector<16x384xf32>
    %51 = vector.extract_strided_slice %2 {offsets = [0, 0], sizes = [1, 384], strides = [1, 1]} : vector<2x384xf32> to vector<1x384xf32>
    %52 = vector.broadcast %51 : vector<1x384xf32> to vector<16x384xf32>
    %53 = arith.mulf %50, %52 : vector<16x384xf32>
    %c0_26 = arith.constant 0 : index
    %c0_27 = arith.constant 0 : index
    %54 = vector.load %arg12[%c0_26, %c0_27] : memref<144x384xf32, #tpu.memory_space<vmem>>, vector<16x384xf32>
    tpu.vector_store %arg12[%c0_26, %c0_27], %53 {strides = array<i32>} : memref<144x384xf32, #tpu.memory_space<vmem>>, vector<16x384xf32>,
    %c32_i32_28 = arith.constant 32 : i32
    %55 = tpu.dynamic_rotate %49 by %c32_i32_28 dim 1 : vector<16x384xf32>, i32 -> vector<16x384xf32>
    %c16_29 = arith.constant 16 : index
    %c0_30 = arith.constant 0 : index
    %56 = vector.load %arg12[%c16_29, %c0_30] : memref<144x384xf32, #tpu.memory_space<vmem>>, vector<16x384xf32>
    tpu.vector_store %arg12[%c16_29, %c0_30], %55 {strides = array<i32>} : memref<144x384xf32, #tpu.memory_space<vmem>>, vector<16x384xf32>,
    %c31_i32_31 = arith.constant 31 : i32
    %57 = tpu.dynamic_rotate %49 by %c31_i32_31 dim 1 : vector<16x384xf32>, i32 -> vector<16x384xf32>
    %58 = vector.extract_strided_slice %2 {offsets = [1, 0], sizes = [1, 384], strides = [1, 1]} : vector<2x384xf32> to vector<1x384xf32>
    %59 = vector.broadcast %58 : vector<1x384xf32> to vector<16x384xf32>
    %60 = arith.mulf %57, %59 : vector<16x384xf32>
    %c32_32 = arith.constant 32 : index
    %c0_33 = arith.constant 0 : index
    %61 = vector.load %arg12[%c32_32, %c0_33] : memref<144x384xf32, #tpu.memory_space<vmem>>, vector<16x384xf32>
    tpu.vector_store %arg12[%c32_32, %c0_33], %60 {strides = array<i32>} : memref<144x384xf32, #tpu.memory_space<vmem>>, vector<16x384xf32>,
    %c1_i32_34 = arith.constant 1 : i32
    %62 = tpu.dynamic_rotate %49 by %c1_i32_34 dim 1 : vector<16x384xf32>, i32 -> vector<16x384xf32>
    %63 = vector.extract_strided_slice %2 {offsets = [0, 0], sizes = [1, 384], strides = [1, 1]} : vector<2x384xf32> to vector<1x384xf32>
    %64 = vector.broadcast %63 : vector<1x384xf32> to vector<16x384xf32>
    %65 = arith.mulf %62, %64 : vector<16x384xf32>
    %c48_35 = arith.constant 48 : index
    %c0_36 = arith.constant 0 : index
    %66 = vector.load %arg12[%c48_35, %c0_36] : memref<144x384xf32, #tpu.memory_space<vmem>>, vector<16x384xf32>
    tpu.vector_store %arg12[%c48_35, %c0_36], %65 {strides = array<i32>} : memref<144x384xf32, #tpu.memory_space<vmem>>, vector<16x384xf32>,
    %c64_37 = arith.constant 64 : index
    %c0_38 = arith.constant 0 : index
    %67 = vector.load %arg12[%c64_37, %c0_38] : memref<144x384xf32, #tpu.memory_space<vmem>>, vector<16x384xf32>
    tpu.vector_store %arg12[%c64_37, %c0_38], %49 {strides = array<i32>} : memref<144x384xf32, #tpu.memory_space<vmem>>, vector<16x384xf32>,
    %c383_i32_39 = arith.constant 383 : i32
    %68 = tpu.dynamic_rotate %49 by %c383_i32_39 dim 1 : vector<16x384xf32>, i32 -> vector<16x384xf32>
    %69 = vector.extract_strided_slice %2 {offsets = [1, 0], sizes = [1, 384], strides = [1, 1]} : vector<2x384xf32> to vector<1x384xf32>
    %70 = vector.broadcast %69 : vector<1x384xf32> to vector<16x384xf32>
    %71 = arith.mulf %68, %70 : vector<16x384xf32>
    %c80_40 = arith.constant 80 : index
    %c0_41 = arith.constant 0 : index
    %72 = vector.load %arg12[%c80_40, %c0_41] : memref<144x384xf32, #tpu.memory_space<vmem>>, vector<16x384xf32>
    tpu.vector_store %arg12[%c80_40, %c0_41], %71 {strides = array<i32>} : memref<144x384xf32, #tpu.memory_space<vmem>>, vector<16x384xf32>,
    %c353_i32_42 = arith.constant 353 : i32
    %73 = tpu.dynamic_rotate %49 by %c353_i32_42 dim 1 : vector<16x384xf32>, i32 -> vector<16x384xf32>
    %74 = vector.extract_strided_slice %2 {offsets = [0, 0], sizes = [1, 384], strides = [1, 1]} : vector<2x384xf32> to vector<1x384xf32>
    %75 = vector.broadcast %74 : vector<1x384xf32> to vector<16x384xf32>
    %76 = arith.mulf %73, %75 : vector<16x384xf32>
    %c96_43 = arith.constant 96 : index
    %c0_44 = arith.constant 0 : index
    %77 = vector.load %arg12[%c96_43, %c0_44] : memref<144x384xf32, #tpu.memory_space<vmem>>, vector<16x384xf32>
    tpu.vector_store %arg12[%c96_43, %c0_44], %76 {strides = array<i32>} : memref<144x384xf32, #tpu.memory_space<vmem>>, vector<16x384xf32>,
    %c352_i32_45 = arith.constant 352 : i32
    %78 = tpu.dynamic_rotate %49 by %c352_i32_45 dim 1 : vector<16x384xf32>, i32 -> vector<16x384xf32>
    %c112_46 = arith.constant 112 : index
    %c0_47 = arith.constant 0 : index
    %79 = vector.load %arg12[%c112_46, %c0_47] : memref<144x384xf32, #tpu.memory_space<vmem>>, vector<16x384xf32>
    tpu.vector_store %arg12[%c112_46, %c0_47], %78 {strides = array<i32>} : memref<144x384xf32, #tpu.memory_space<vmem>>, vector<16x384xf32>,
    %c351_i32_48 = arith.constant 351 : i32
    %80 = tpu.dynamic_rotate %49 by %c351_i32_48 dim 1 : vector<16x384xf32>, i32 -> vector<16x384xf32>
    %81 = vector.extract_strided_slice %2 {offsets = [1, 0], sizes = [1, 384], strides = [1, 1]} : vector<2x384xf32> to vector<1x384xf32>
    %82 = vector.broadcast %81 : vector<1x384xf32> to vector<16x384xf32>
    %83 = arith.mulf %80, %82 : vector<16x384xf32>
    %c128_49 = arith.constant 128 : index
    %c0_50 = arith.constant 0 : index
    %84 = vector.load %arg12[%c128_49, %c0_50] : memref<144x384xf32, #tpu.memory_space<vmem>>, vector<16x384xf32>
    tpu.vector_store %arg12[%c128_49, %c0_50], %83 {strides = array<i32>} : memref<144x384xf32, #tpu.memory_space<vmem>>, vector<16x384xf32>,
    %c0_51 = arith.constant 0 : index
    %c0_52 = arith.constant 0 : index
    %85 = vector.load %arg3[%c0_51, %c0_52] : memref<16x144xf32, #tpu.memory_space<vmem>>, vector<16x144xf32>
    %c0_53 = arith.constant 0 : index
    %c0_54 = arith.constant 0 : index
    %86 = vector.load %arg12[%c0_53, %c0_54] : memref<144x384xf32, #tpu.memory_space<vmem>>, vector<144x384xf32>
    %cst_55 = arith.constant dense<0.000000e+00> : vector<16x384xf32>
    %87 = tpu.matmul %85, %86, %cst_55 {dimension_numbers = #tpu.dot_dimension_numbers<[1], [0], [0], [1], [0, 0, 1, 1], [], []>} : vector<16x144xf32>, vector<144x384xf32>, vector<16x384xf32> -> vector<16x384xf32>
    %88 = vector.extract_strided_slice %40 {offsets = [0, 64], sizes = [16, 256], strides = [1, 1]} : vector<16x384xf32> to vector<16x256xf32>
    %89 = vector.extract_strided_slice %87 {offsets = [0, 64], sizes = [16, 256], strides = [1, 1]} : vector<16x384xf32> to vector<16x256xf32>
    %90 = arith.addf %88, %89 : vector<16x256xf32>
    %c0_56 = arith.constant 0 : index
    %c0_57 = arith.constant 0 : index
    %91 = vector.load %arg8[%c0_56, %c0_57] : memref<16x1xf32, #tpu.memory_space<vmem>>, vector<16x1xf32>
    %92 = vector.broadcast %91 : vector<16x1xf32> to vector<16x256xf32>
    %93 = arith.addf %90, %92 : vector<16x256xf32>
    %cst_58 = arith.constant 0.000000e+00 : f32
    %94 = vector.broadcast %cst_58 : f32 to vector<16x256xf32>
    %95 = arith.maximumf %93, %94 : vector<16x256xf32>
    %c0_59 = arith.constant 0 : index
    %c0_60 = arith.constant 0 : index
    %96 = vector.load %arg4[%c0_59, %c0_60] : memref<16x16xf32, #tpu.memory_space<vmem>>, vector<16x16xf32>
    %cst_61 = arith.constant dense<0.000000e+00> : vector<16x256xf32>
    %97 = tpu.matmul %96, %95, %cst_61 {dimension_numbers = #tpu.dot_dimension_numbers<[1], [0], [0], [1], [0, 0, 1, 1], [], []>} : vector<16x16xf32>, vector<16x256xf32>, vector<16x256xf32> -> vector<16x256xf32>
    %c0_62 = arith.constant 0 : index
    %c0_63 = arith.constant 0 : index
    %98 = vector.load %arg9[%c0_62, %c0_63] : memref<16x1xf32, #tpu.memory_space<vmem>>, vector<16x1xf32>
    %99 = vector.broadcast %98 : vector<16x1xf32> to vector<16x256xf32>
    %100 = arith.addf %97, %99 : vector<16x256xf32>
    %c0_64 = arith.constant 0 : index
    %c0_65 = arith.constant 0 : index
    %c0_66 = arith.constant 0 : index
    %101 = vector.load %arg10[%c0_64, %c0_65, %c0_66] : memref<1x16x256xf32, #tpu.memory_space<vmem>>, vector<1x16x256xf32>
    %102 = vector.shape_cast %101 : vector<1x16x256xf32> to vector<16x256xf32>
    %103 = vector.shape_cast %100 : vector<16x256xf32> to vector<1x16x256xf32>
    tpu.vector_store %arg10[%c0_64, %c0_65, %c0_66], %103 {strides = array<i32>} : memref<1x16x256xf32, #tpu.memory_space<vmem>>, vector<1x16x256xf32>,
    return
  }
  func.func @transform_0(%arg0: i32, %arg1: i32) -> (i32, i32, i32, i32) {
    %c0_i32 = arith.constant 0 : i32
    %c0_i32_0 = arith.constant 0 : i32
    %c0_i32_1 = arith.constant 0 : i32
    return %arg0, %arg1, %c0_i32, %c0_i32_0 : i32, i32, i32, i32
  }
  func.func @transform_1(%arg0: i32, %arg1: i32) -> (i32, i32) {
    %c0_i32 = arith.constant 0 : i32
    %c0_i32_0 = arith.constant 0 : i32
    %c0_i32_1 = arith.constant 0 : i32
    return %c0_i32, %c0_i32_0 : i32, i32
  }
  func.func @transform_2(%arg0: i32, %arg1: i32) -> (i32, i32) {
    %c0_i32 = arith.constant 0 : i32
    %c0_i32_0 = arith.constant 0 : i32
    %c0_i32_1 = arith.constant 0 : i32
    return %c0_i32, %c0_i32_0 : i32, i32
  }
  func.func @transform_3(%arg0: i32, %arg1: i32) -> (i32, i32) {
    %c0_i32 = arith.constant 0 : i32
    %c0_i32_0 = arith.constant 0 : i32
    %c0_i32_1 = arith.constant 0 : i32
    return %c0_i32, %c0_i32_0 : i32, i32
  }
  func.func @transform_4(%arg0: i32, %arg1: i32) -> (i32, i32, i32) {
    %c0_i32 = arith.constant 0 : i32
    %c0_i32_0 = arith.constant 0 : i32
    %c0_i32_1 = arith.constant 0 : i32
    return %arg1, %c0_i32, %c0_i32_0 : i32, i32, i32
  }
  func.func @transform_5(%arg0: i32, %arg1: i32) -> (i32, i32) {
    %c0_i32 = arith.constant 0 : i32
    %c0_i32_0 = arith.constant 0 : i32
    %c0_i32_1 = arith.constant 0 : i32
    return %c0_i32, %c0_i32_0 : i32, i32
  }
  func.func @transform_6(%arg0: i32, %arg1: i32) -> (i32, i32) {
    %c0_i32 = arith.constant 0 : i32
    %c0_i32_0 = arith.constant 0 : i32
    %c0_i32_1 = arith.constant 0 : i32
    return %c0_i32, %c0_i32_0 : i32, i32
  }
  func.func @transform_7(%arg0: i32, %arg1: i32) -> (i32, i32) {
    %c0_i32 = arith.constant 0 : i32
    %c0_i32_0 = arith.constant 0 : i32
    %c0_i32_1 = arith.constant 0 : i32
    return %c0_i32, %c0_i32_0 : i32, i32
  }
  func.func @transform_8(%arg0: i32, %arg1: i32) -> (i32, i32, i32) {
    %c0_i32 = arith.constant 0 : i32
    %c0_i32_0 = arith.constant 0 : i32
    return %arg0, %c0_i32, %arg1 : i32, i32, i32
  }
}

</mosaic_0001>

<llo_original>
// kernel: model_forward.1
$region0: #{model_forward.1}
  #allocation0 [shape = 'u32[]', space=smem, size = 0x4, offset = 0x4, fixed_abs, tag = 'smem constant byte address 0x4 - core index']
  #allocation1 [shape = 'u32[144,128]{1,0:T(1,128)}', space=vmem, size = 0x12000, scoped, tag = 'internal scratch']
  #allocation2 [shape = 'f32[144,384]{1,0:T(8,128)}', space=vmem, size = 0x36000, scoped, tag = 'scratch operand']
  #allocation3 [shape = 'f32[144,384]{1,0:T(8,128)}', space=vmem, size = 0x36000, scoped, tag = 'scratch operand']
  %s0 = inlined_call_operand.vmem [shape: f32[2,4,16,384], index: 0, kind: input, shape index: {}]
  %s1 = inlined_call_operand.vmem [shape: f32[16,144], index: 1, kind: input, shape index: {}]
  %s2 = inlined_call_operand.vmem [shape: f32[16,16], index: 2, kind: input, shape index: {}]
  %s3 = inlined_call_operand.vmem [shape: f32[2,384], index: 3, kind: input, shape index: {}]
  %s4 = inlined_call_operand.vmem [shape: f32[4,1,384], index: 4, kind: input, shape index: {}]
  %s5 = inlined_call_operand.vmem [shape: f32[16,1], index: 5, kind: input, shape index: {}]
  %s6 = inlined_call_operand.vmem [shape: f32[16,1], index: 6, kind: input, shape index: {}]
  %s7 = inlined_call_operand.vmem [shape: f32[16,1], index: 7, kind: input, shape index: {}]
  %s8 = inlined_call_operand.vmem [shape: f32[2,16,1024], index: 8, kind: output, shape index: {}]
  %s9 = sld [smem:[#allocation0]]
  $region84: #{model_forward.1} parent=0
    _
  %s11 = ssub.s32 1, %s9
  %s12 = scalar_select 0, %s11, %s9
  $region1: #{model_forward.1} parent=0
    #allocation4 [shape = 'u8[32768]{0}', space=vmem, size = 0x8000, scoped, tag = 'output window, operand 0']
    loop: start=0, step=1, limit=10
    $region2: #{model_forward.1} parent=1 // loop_pre_header
      _
    $region3: #{model_forward.1} parent=1 // loop_header
      %s14 = sphi 0, %s18
      %p15 = scmp.ge.s32.totalorder %s14, 10
      %s21 = sphi 0, %s33
      %s22 = sphi 0, %s29
      %s23 = sphi 0, %s21
      %s24 = sphi 0, %s22
      %s25 = sphi 0, %s23
      %s26 = sphi 0, %s24
      %s38 = sphi 0, %s40
      %s41 = sphi 0, %s38
      %s42 = sphi 0, %s41
      %s58 = sphi 0, %s42
      %s62 = sphi 0, %s62
      %s64 = sphi 0, %s62
      %s65 = sphi 0, %s64
      %s79 = sphi 0, %s65
      %s83 = sphi 0, %s83
      %s85 = sphi 0, %s83
      %s86 = sphi 0, %s85
      %s100 = sphi 0, %s86
      %s104 = sphi 0, %s104
      %s106 = sphi 0, %s104
      %s107 = sphi 0, %s106
      %s121 = sphi 0, %s107
      %s127 = sphi 0, %s129
      %s130 = sphi 0, %s127
      %s131 = sphi 0, %s130
      %s147 = sphi 0, %s131
      %s151 = sphi 0, %s151
      %s153 = sphi 0, %s151
      %s154 = sphi 0, %s153
      %s168 = sphi 0, %s154
      %s172 = sphi 0, %s172
      %s174 = sphi 0, %s172
      %s175 = sphi 0, %s174
      %s189 = sphi 0, %s175
      %s193 = sphi 0, %s193
      %s195 = sphi 0, %s193
      %s196 = sphi 0, %s195
      %s210 = sphi 0, %s196
      %s218 = sphi 0, %s220
      %s221 = sphi 0, %s218
      %s222 = sphi 0, %s221
      %s238 = sphi 0, %s222
    $region4: #{model_forward.1} parent=1 // loop_header_branch
      %17 = sbr.rel (%p15) target = $region8
    $region5: #{model_forward.1} parent=1 // loop_body
      %s19 = ssub.s32 %s14, 1
      %s20 = ssub.s32 %s14, 2
      %s27 = sadd.s32 1, %s22
      %p28 = scmp.ge.s32.totalorder %s27, 4
      %s29 = scalar_select %p28, 0, %s27
      %s30 = sadd.s32 1, %s21
      %s31 = scalar_select %p28, %s30, %s21
      %p32 = scmp.ge.s32.totalorder %s31, 2
      %s33 = scalar_select %p32, 0, %s31
      %s34 = ssub.s32 %s21, %s33
      %s35 = ssub.s32 %s22, %s29
      %s36 = sor.u32 %s34, %s35
      %p37 = scmp.eq.s32.totalorder %s36, 0
      %s39 = sadd.s32 %s38, 1
      %s40 = scalar_select %p37, %s38, %s39
      %p43 = pneg %p37
      %p44 = scmp.eq.s32.totalorder %s14, 7
      %p45 = por %p43, %p44
      %p46 = scmp.ne.s32.totalorder %s38, %s41
      %p47 = scmp.eq.s32.totalorder %s14, 0
      %p48 = por %p46, %p47
      %p49 = scmp.ne.s32.totalorder %s38, %s41
      %p50 = scmp.eq.s32.totalorder %s19, 7
      %p51 = por %p49, %p50
      %p52 = scmp.ne.s32.totalorder %s41, %s42
      %p53 = scmp.eq.s32.totalorder %s19, 0
      %p54 = por %p52, %p53
      %p55 = scmp.ne.s32.totalorder %s41, %s42
      %p56 = scmp.eq.s32.totalorder %s20, 7
      %p57 = por %p55, %p56
      %p59 = scmp.ne.s32.totalorder %s42, %s58
      %p60 = scmp.eq.s32.totalorder %s20, 0
      %p61 = por %p59, %p60
      %s63 = sadd.s32 %s62, 1
      %p66 = scmp.eq.s32.totalorder %s14, 7
      %p67 = scmp.ne.s32.totalorder %s62, %s64
      %p68 = scmp.eq.s32.totalorder %s14, 0
      %p69 = por %p67, %p68
      %p70 = scmp.ne.s32.totalorder %s62, %s64
      %p71 = scmp.eq.s32.totalorder %s19, 7
      %p72 = por %p70, %p71
      %p73 = scmp.ne.s32.totalorder %s64, %s65
      %p74 = scmp.eq.s32.totalorder %s19, 0
      %p75 = por %p73, %p74
      %p76 = scmp.ne.s32.totalorder %s64, %s65
      %p77 = scmp.eq.s32.totalorder %s20, 7
      %p78 = por %p76, %p77
      %p80 = scmp.ne.s32.totalorder %s65, %s79
      %p81 = scmp.eq.s32.totalorder %s20, 0
      %p82 = por %p80, %p81
      %s84 = sadd.s32 %s83, 1
      %p87 = scmp.eq.s32.totalorder %s14, 7
      %p88 = scmp.ne.s32.totalorder %s83, %s85
      %p89 = scmp.eq.s32.totalorder %s14, 0
      %p90 = por %p88, %p89
      %p91 = scmp.ne.s32.totalorder %s83, %s85
      %p92 = scmp.eq.s32.totalorder %s19, 7
      %p93 = por %p91, %p92
      %p94 = scmp.ne.s32.totalorder %s85, %s86
      %p95 = scmp.eq.s32.totalorder %s19, 0
      %p96 = por %p94, %p95
      %p97 = scmp.ne.s32.totalorder %s85, %s86
      %p98 = scmp.eq.s32.totalorder %s20, 7
      %p99 = por %p97, %p98
      %p101 = scmp.ne.s32.totalorder %s86, %s100
      %p102 = scmp.eq.s32.totalorder %s20, 0
      %p103 = por %p101, %p102
      %s105 = sadd.s32 %s104, 1
      %p108 = scmp.eq.s32.totalorder %s14, 7
      %p109 = scmp.ne.s32.totalorder %s104, %s106
      %p110 = scmp.eq.s32.totalorder %s14, 0
      %p111 = por %p109, %p110
      %p112 = scmp.ne.s32.totalorder %s104, %s106
      %p113 = scmp.eq.s32.totalorder %s19, 7
      %p114 = por %p112, %p113
      %p115 = scmp.ne.s32.totalorder %s106, %s107
      %p116 = scmp.eq.s32.totalorder %s19, 0
      %p117 = por %p115, %p116
      %p118 = scmp.ne.s32.totalorder %s106, %s107
      %p119 = scmp.eq.s32.totalorder %s20, 7
      %p120 = por %p118, %p119
      %p122 = scmp.ne.s32.totalorder %s107, %s121
      %p123 = scmp.eq.s32.totalorder %s20, 0
      %p124 = por %p122, %p123
      %s125 = ssub.s32 %s22, %s29
      %p126 = scmp.eq.s32.totalorder %s125, 0
      %s128 = sadd.s32 %s127, 1
      %s129 = scalar_select %p126, %s127, %s128
      %p132 = pneg %p126
      %p133 = scmp.eq.s32.totalorder %s14, 7
      %p134 = por %p132, %p133
      %p135 = scmp.ne.s32.totalorder %s127, %s130
      %p136 = scmp.eq.s32.totalorder %s14, 0
      %p137 = por %p135, %p136
      %p138 = scmp.ne.s32.totalorder %s127, %s130
      %p139 = scmp.eq.s32.totalorder %s19, 7
      %p140 = por %p138, %p139
      %p141 = scmp.ne.s32.totalorder %s130, %s131
      %p142 = scmp.eq.s32.totalorder %s19, 0
      %p143 = por %p141, %p142
      %p144 = scmp.ne.s32.totalorder %s130, %s131
      %p145 = scmp.eq.s32.totalorder %s20, 7
      %p146 = por %p144, %p145
      %p148 = scmp.ne.s32.totalorder %s131, %s147
      %p149 = scmp.eq.s32.totalorder %s20, 0
      %p150 = por %p148, %p149
      %s152 = sadd.s32 %s151, 1
      %p155 = scmp.eq.s32.totalorder %s14, 7
      %p156 = scmp.ne.s32.totalorder %s151, %s153
      %p157 = scmp.eq.s32.totalorder %s14, 0
      %p158 = por %p156, %p157
      %p159 = scmp.ne.s32.totalorder %s151, %s153
      %p160 = scmp.eq.s32.totalorder %s19, 7
      %p161 = por %p159, %p160
      %p162 = scmp.ne.s32.totalorder %s153, %s154
      %p163 = scmp.eq.s32.totalorder %s19, 0
      %p164 = por %p162, %p163
      %p165 = scmp.ne.s32.totalorder %s153, %s154
      %p166 = scmp.eq.s32.totalorder %s20, 7
      %p167 = por %p165, %p166
      %p169 = scmp.ne.s32.totalorder %s154, %s168
      %p170 = scmp.eq.s32.totalorder %s20, 0
      %p171 = por %p169, %p170
      %s173 = sadd.s32 %s172, 1
      %p176 = scmp.eq.s32.totalorder %s14, 7
      %p177 = scmp.ne.s32.totalorder %s172, %s174
      %p178 = scmp.eq.s32.totalorder %s14, 0
      %p179 = por %p177, %p178
      %p180 = scmp.ne.s32.totalorder %s172, %s174
      %p181 = scmp.eq.s32.totalorder %s19, 7
      %p182 = por %p180, %p181
      %p183 = scmp.ne.s32.totalorder %s174, %s175
      %p184 = scmp.eq.s32.totalorder %s19, 0
      %p185 = por %p183, %p184
      %p186 = scmp.ne.s32.totalorder %s174, %s175
      %p187 = scmp.eq.s32.totalorder %s20, 7
      %p188 = por %p186, %p187
      %p190 = scmp.ne.s32.totalorder %s175, %s189
      %p191 = scmp.eq.s32.totalorder %s20, 0
      %p192 = por %p190, %p191
      %s194 = sadd.s32 %s193, 1
      %p197 = scmp.eq.s32.totalorder %s14, 7
      %p198 = scmp.ne.s32.totalorder %s193, %s195
      %p199 = scmp.eq.s32.totalorder %s14, 0
      %p200 = por %p198, %p199
      %p201 = scmp.ne.s32.totalorder %s193, %s195
      %p202 = scmp.eq.s32.totalorder %s19, 7
      %p203 = por %p201, %p202
      %p204 = scmp.ne.s32.totalorder %s195, %s196
      %p205 = scmp.eq.s32.totalorder %s19, 0
      %p206 = por %p204, %p205
      %p207 = scmp.ne.s32.totalorder %s195, %s196
      %p208 = scmp.eq.s32.totalorder %s20, 7
      %p209 = por %p207, %p208
      %p211 = scmp.ne.s32.totalorder %s196, %s210
      %p212 = scmp.eq.s32.totalorder %s20, 0
      %p213 = por %p211, %p212
      %s214 = ssub.s32 %s21, %s33
      %s215 = ssub.s32 %s22, %s29
      %s216 = sor.u32 %s214, %s215
      %p217 = scmp.eq.s32.totalorder %s216, 0
      %s219 = sadd.s32 %s218, 1
      %s220 = scalar_select %p217, %s218, %s219
      %p223 = pneg %p217
      %p224 = scmp.eq.s32.totalorder %s14, 7
      %p225 = por %p223, %p224
      %p226 = scmp.ne.s32.totalorder %s218, %s221
      %p227 = scmp.eq.s32.totalorder %s14, 0
      %p228 = por %p226, %p227
      %p229 = scmp.ne.s32.totalorder %s218, %s221
      %p230 = scmp.eq.s32.totalorder %s19, 7
      %p231 = por %p229, %p230
      %p232 = scmp.ne.s32.totalorder %s221, %s222
      %p233 = scmp.eq.s32.totalorder %s19, 0
      %p234 = por %p232, %p233
      %p235 = scmp.ne.s32.totalorder %s221, %s222
      %p236 = scmp.eq.s32.totalorder %s20, 7
      %p237 = por %p235, %p236
      %p239 = scmp.ne.s32.totalorder %s222, %s238
      %p240 = scmp.eq.s32.totalorder %s20, 0
      %p241 = por %p239, %p240
      %p242 = scmp.le.s32.totalorder 1, %s14
      %p243 = scmp.lt.s32.totalorder %s14, 9
      %p244 = pnand %p242, %p243
      %p245 = pneg %p244
      // Predicated region
      $region9: #{model_forward.1} parent=5 // pred_check
        _
      $region10: #{model_forward.1} parent=5 // pred_check_branch
        %247 = sbr.rel (%p244) target = $region12
      $region11: #{model_forward.1} parent=5 // pred_region
        %s248 = ssub.s32 %s14, 1
        // Predicated region
        $region13: #{model_forward.1} parent=11 // pred_check
          %p249 = pneg %p75
        $region14: #{model_forward.1} parent=11 // pred_check_branch
          %251 = sbr.rel (%p249) target = $region16
        $region15: #{model_forward.1} parent=11 // pred_region
          _
        $region16: #{model_forward.1} parent=11 // pred_fallthru
          _
        // Predicated region
        $region17: #{model_forward.1} parent=11 // pred_check
          %p252 = pneg %p96
        $region18: #{model_forward.1} parent=11 // pred_check_branch
          %254 = sbr.rel (%p252) target = $region20
        $region19: #{model_forward.1} parent=11 // pred_region
          _
        $region20: #{model_forward.1} parent=11 // pred_fallthru
          _
        // Predicated region
        $region21: #{model_forward.1} parent=11 // pred_check
          %p255 = pneg %p117
        $region22: #{model_forward.1} parent=11 // pred_check_branch
          %257 = sbr.rel (%p255) target = $region24
        $region23: #{model_forward.1} parent=11 // pred_region
          _
        $region24: #{model_forward.1} parent=11 // pred_fallthru
          _
        // Predicated region
        $region25: #{model_forward.1} parent=11 // pred_check
          %p258 = pneg %p164
        $region26: #{model_forward.1} parent=11 // pred_check_branch
          %260 = sbr.rel (%p258) target = $region28
        $region27: #{model_forward.1} parent=11 // pred_region
          _
        $region28: #{model_forward.1} parent=11 // pred_fallthru
          _
        // Predicated region
        $region29: #{model_forward.1} parent=11 // pred_check
          %p261 = pneg %p185
        $region30: #{model_forward.1} parent=11 // pred_check_branch
          %263 = sbr.rel (%p261) target = $region32
        $region31: #{model_forward.1} parent=11 // pred_region
          _
        $region32: #{model_forward.1} parent=11 // pred_fallthru
          _
        // Predicated region
        $region33: #{model_forward.1} parent=11 // pred_check
          %p264 = pneg %p206
        $region34: #{model_forward.1} parent=11 // pred_check_branch
          %266 = sbr.rel (%p264) target = $region36
        $region35: #{model_forward.1} parent=11 // pred_region
          _
        $region36: #{model_forward.1} parent=11 // pred_fallthru
          _
      $region12: #{model_forward.1} parent=5 // pred_fallthru
        _
      %p267 = scmp.lt.s32.totalorder %s14, 8
      // Predicated region
      $region37: #{model_forward.1} parent=5 // pred_check
        %p268 = pneg %p267
      $region38: #{model_forward.1} parent=5 // pred_check_branch
        %270 = sbr.rel (%p268) target = $region40
      $region39: #{model_forward.1} parent=5 // pred_region
        // Predicated region
        $region41: #{model_forward.1} parent=39 // pred_check
          %p271 = pneg %p48
        $region42: #{model_forward.1} parent=39 // pred_check_branch
          %273 = sbr.rel (%p271) target = $region44
        $region43: #{model_forward.1} parent=39 // pred_region
          %p274 = scmp.lt.s32.totalorder %s21, 1
          %s275 = scalar_select %p274, %s21, 1
          %p276 = scmp.lt.s32.totalorder %s22, 3
          %s277 = scalar_select %p276, %s22, 3
          %s278 = smul.addr %s277, 6
          %s279 = smul.addr %s275, 24
          %s280 = sadd.s32 %s278, %s279
          %s281 = smul.addr %s280, 8
          %s282 = scalar_lea.vmem %s0, %s281
        $region44: #{model_forward.1} parent=39 // pred_fallthru
          _
        // Predicated region
        $region45: #{model_forward.1} parent=39 // pred_check
          %p283 = pneg %p137
        $region46: #{model_forward.1} parent=39 // pred_check_branch
          %285 = sbr.rel (%p283) target = $region48
        $region47: #{model_forward.1} parent=39 // pred_region
          %p286 = scmp.lt.s32.totalorder %s22, 3
          %s287 = scalar_select %p286, %s22, 3
          %s288 = smul.addr %s287, 3
          %s289 = scalar_lea.vmem %s4, %s288
        $region48: #{model_forward.1} parent=39 // pred_fallthru
          _
      $region40: #{model_forward.1} parent=5 // pred_fallthru
        _
      %p290 = scmp.le.s32.totalorder 1, %s14
      %p291 = scmp.lt.s32.totalorder %s14, 9
      %p292 = pnand %p290, %p291
      %p293 = pneg %p292
      // Predicated region
      $region49: #{model_forward.1} parent=5 // pred_check
        _
      $region50: #{model_forward.1} parent=5 // pred_check_branch
        %295 = sbr.rel (%p292) target = $region52
      $region51: #{model_forward.1} parent=5 // pred_region
        %s296 = ssub.s32 %s14, 1
        %p297 = scmp.lt.s32.totalorder %s23, 1
        %s298 = scalar_select %p297, %s23, 1
        %p299 = scmp.lt.s32.totalorder %s24, 3
        %s300 = scalar_select %p299, %s24, 3
        %s301 = smul.addr %s300, 6
        %s302 = smul.addr %s298, 24
        %s303 = sadd.s32 %s301, %s302
        %s304 = smul.addr %s303, 8
        %s305 = scalar_lea.vmem %s0, %s304
        %p306 = pneg %p54
        %p307 = pneg %p51
        %p308 = pneg %p75
        %p309 = pneg %p72
        %p310 = pneg %p96
        %p311 = pneg %p93
        %p312 = pneg %p117
        %p313 = pneg %p114
        %p314 = scmp.lt.s32.totalorder %s24, 3
        %s315 = scalar_select %p314, %s24, 3
        %s316 = smul.addr %s315, 3
        %s317 = scalar_lea.vmem %s4, %s316
        %p318 = pneg %p143
        %p319 = pneg %p140
        %p320 = pneg %p164
        %p321 = pneg %p161
        %p322 = pneg %p185
        %p323 = pneg %p182
        %p324 = pneg %p206
        %p325 = pneg %p203
        %p326 = pneg %p234
        %p327 = pneg %p231
        %s328 = sand.u32 %s221, 1
        %s329 = sand.u32 %s221, 1
        %s330 = smul.addr %s329, 32
        %s331 = scalar_lea.vmem [#allocation4], %s330
        %p332 = scmp.lt.s32.totalorder %s23, 1
        %s333 = scalar_select %p332, %s23, 1
        %p334 = scmp.lt.s32.totalorder %s24, 3
        %s335 = scalar_select %p334, %s24, 3
        %s336 = smul.addr %s335, 6
        %s337 = smul.addr %s333, 24
        %s338 = sadd.s32 %s336, %s337
        %s339 = smul.addr %s338, 8
        %s340 = scalar_lea.vmem %s0, %s339
        %p341 = scmp.lt.s32.totalorder %s24, 3
        %s342 = scalar_select %p341, %s24, 3
        %s343 = smul.addr %s342, 3
        %s344 = scalar_lea.vmem %s4, %s343
        %s345 = smul.u32 2, %s24
        %v346 = vld [vmem:[%s340] sm:$0xff]
        %v347 = vld [vmem:[%s340 + $0x8] sm:$0xff]
        %v348 = vld [vmem:[%s340 + $0x10] sm:$0xff]
        %v349 = vld [vmem:[%s340 + $0x18] sm:$0xff]
        %v350 = vld [vmem:[%s340 + $0x20] sm:$0xff]
        %v351 = vld [vmem:[%s340 + $0x28] sm:$0xff]
        %v352 = vld [vmem:[%s3] sm:$0x3f]
        %353 = vrot.lane.b32.xlu0 %v346, 33
        %v354 = vpop.permute.xlu0 %353
        %355 = vrot.lane.b32.xlu0 %v349, 33
        %v356 = vpop.permute.xlu0 %355
        %357 = vrot.lane.b32.xlu0 %v347, 33
        %v358 = vpop.permute.xlu0 %357
        %359 = vrot.lane.b32.xlu0 %v350, 33
        %v360 = vpop.permute.xlu0 %359
        %361 = vrot.lane.b32.xlu0 %v348, 33
        %v362 = vpop.permute.xlu0 %361
        %363 = vrot.lane.b32.xlu0 %v351, 33
        %v364 = vpop.permute.xlu0 %363
        %v365 = vlaneseq
        %v366 = vand.u32 %v365, 127
        %vm367 = vcmp.lt.s32.totalorder %v366, 33
        %v368 = vsel %vm367, %v358, %v362
        %v369 = vsel %vm367, %v360, %v364
        %v370 = vsel %vm367, %v354, %v358
        %v371 = vsel %vm367, %v356, %v360
        %v372 = vsel %vm367, %v362, %v354
        %v373 = vsel %vm367, %v364, %v356
        %v375 = vlaneseq
        %v376 = vshrl.u32 %v375, 7
        %v377 = vsub.s32 0, %v376
        %v378 = vrot.slane %v352, %v377
        %v379 = vlaneseq
        %v380 = vshrl.u32 %v379, 7
        %v381 = vsub.s32 2, %v380
        %v382 = vrot.slane %v352, %v381
        %v383 = vlaneseq
        %v384 = vshrl.u32 %v383, 7
        %v385 = vsub.s32 4, %v384
        %v386 = vrot.slane %v352, %v385
        %v390 = vlaneseq
        %v391 = vshrl.u32 %v390, 7
        %v392 = vsub.s32 0, %v391
        %v393 = vrot.slane %v378, %v392
        %v394 = vlaneseq
        %v395 = vshrl.u32 %v394, 7
        %v396 = vsub.s32 0, %v395
        %v397 = vrot.slane %v382, %v396
        %v398 = vlaneseq
        %v399 = vshrl.u32 %v398, 7
        %v400 = vsub.s32 0, %v399
        %v401 = vrot.slane %v386, %v400
        %v402 = vmul.f32 %v372, %v393
        %v403 = vmul.f32 %v370, %v397
        %v404 = vmul.f32 %v368, %v401
        %v405 = vmul.f32 %v373, %v393
        %v406 = vmul.f32 %v371, %v397
        %v407 = vmul.f32 %v369, %v401
        %408 = vst [vmem:[#allocation2] sm:$0xff] %v402
        %409 = vst [vmem:[#allocation2 + $0x8] sm:$0xff] %v403
        %410 = vst [vmem:[#allocation2 + $0x10] sm:$0xff] %v404
        %411 = vst [vmem:[#allocation2 + $0x18] sm:$0xff] %v405
        %412 = vst [vmem:[#allocation2 + $0x20] sm:$0xff] %v406
        %413 = vst [vmem:[#allocation2 + $0x28] sm:$0xff] %v407
        %414 = vrot.lane.b32.xlu0 %v346, 32
        %v415 = vpop.permute.xlu0 %414
        %416 = vrot.lane.b32.xlu0 %v349, 32
        %v417 = vpop.permute.xlu0 %416
        %418 = vrot.lane.b32.xlu0 %v347, 32
        %v419 = vpop.permute.xlu0 %418
        %420 = vrot.lane.b32.xlu0 %v350, 32
        %v421 = vpop.permute.xlu0 %420
        %422 = vrot.lane.b32.xlu0 %v348, 32
        %v423 = vpop.permute.xlu0 %422
        %424 = vrot.lane.b32.xlu0 %v351, 32
        %v425 = vpop.permute.xlu0 %424
        %vm426 = vcmp.lt.s32.totalorder %v366, 32
        %v427 = vsel %vm426, %v419, %v423
        %v428 = vsel %vm426, %v421, %v425
        %v429 = vsel %vm426, %v415, %v419
        %v430 = vsel %vm426, %v417, %v421
        %v431 = vsel %vm426, %v423, %v415
        %v432 = vsel %vm426, %v425, %v417
        %433 = vst [vmem:[#allocation2 + $0x30] sm:$0xff] %v431
        %434 = vst [vmem:[#allocation2 + $0x38] sm:$0xff] %v429
        %435 = vst [vmem:[#allocation2 + $0x40] sm:$0xff] %v427
        %436 = vst [vmem:[#allocation2 + $0x48] sm:$0xff] %v432
        %437 = vst [vmem:[#allocation2 + $0x50] sm:$0xff] %v430
        %438 = vst [vmem:[#allocation2 + $0x58] sm:$0xff] %v428
        %439 = vrot.lane.b32.xlu0 %v346, 31
        %v440 = vpop.permute.xlu0 %439
        %441 = vrot.lane.b32.xlu0 %v349, 31
        %v442 = vpop.permute.xlu0 %441
        %443 = vrot.lane.b32.xlu0 %v347, 31
        %v444 = vpop.permute.xlu0 %443
        %445 = vrot.lane.b32.xlu0 %v350, 31
        %v446 = vpop.permute.xlu0 %445
        %447 = vrot.lane.b32.xlu0 %v348, 31
        %v448 = vpop.permute.xlu0 %447
        %449 = vrot.lane.b32.xlu0 %v351, 31
        %v450 = vpop.permute.xlu0 %449
        %vm451 = vcmp.lt.s32.totalorder %v366, 31
        %v452 = vsel %vm451, %v444, %v448
        %v453 = vsel %vm451, %v446, %v450
        %v454 = vsel %vm451, %v440, %v444
        %v455 = vsel %vm451, %v442, %v446
        %v456 = vsel %vm451, %v448, %v440
        %v457 = vsel %vm451, %v450, %v442
        %v458 = vlaneseq
        %v459 = vshrl.u32 %v458, 7
        %v460 = vsub.s32 1, %v459
        %v461 = vrot.slane %v352, %v460
        %v462 = vlaneseq
        %v463 = vshrl.u32 %v462, 7
        %v464 = vsub.s32 3, %v463
        %v465 = vrot.slane %v352, %v464
        %v466 = vlaneseq
        %v467 = vshrl.u32 %v466, 7
        %v468 = vsub.s32 5, %v467
        %v469 = vrot.slane %v352, %v468
        %v473 = vlaneseq
        %v474 = vshrl.u32 %v473, 7
        %v475 = vsub.s32 1, %v474
        %v476 = vrot.slane %v461, %v475
        %v477 = vlaneseq
        %v478 = vshrl.u32 %v477, 7
        %v479 = vsub.s32 1, %v478
        %v480 = vrot.slane %v465, %v479
        %v481 = vlaneseq
        %v482 = vshrl.u32 %v481, 7
        %v483 = vsub.s32 1, %v482
        %v484 = vrot.slane %v469, %v483
        %v485 = vmul.f32 %v456, %v476
        %v486 = vmul.f32 %v454, %v480
        %v487 = vmul.f32 %v452, %v484
        %v488 = vmul.f32 %v457, %v476
        %v489 = vmul.f32 %v455, %v480
        %v490 = vmul.f32 %v453, %v484
        %491 = vst [vmem:[#allocation2 + $0x60] sm:$0xff] %v485
        %492 = vst [vmem:[#allocation2 + $0x68] sm:$0xff] %v486
        %493 = vst [vmem:[#allocation2 + $0x70] sm:$0xff] %v487
        %494 = vst [vmem:[#allocation2 + $0x78] sm:$0xff] %v488
        %495 = vst [vmem:[#allocation2 + $0x80] sm:$0xff] %v489
        %496 = vst [vmem:[#allocation2 + $0x88] sm:$0xff] %v490
        %497 = vrot.lane.b32.xlu0 %v346, 1
        %v498 = vpop.permute.xlu0 %497
        %499 = vrot.lane.b32.xlu0 %v349, 1
        %v500 = vpop.permute.xlu0 %499
        %501 = vrot.lane.b32.xlu0 %v347, 1
        %v502 = vpop.permute.xlu0 %501
        %503 = vrot.lane.b32.xlu0 %v350, 1
        %v504 = vpop.permute.xlu0 %503
        %505 = vrot.lane.b32.xlu0 %v348, 1
        %v506 = vpop.permute.xlu0 %505
        %507 = vrot.lane.b32.xlu0 %v351, 1
        %v508 = vpop.permute.xlu0 %507
        %vm509 = vcmp.lt.s32.totalorder %v366, 1
        %v510 = vsel %vm509, %v502, %v506
        %v511 = vsel %vm509, %v504, %v508
        %v512 = vsel %vm509, %v498, %v502
        %v513 = vsel %vm509, %v500, %v504
        %v514 = vsel %vm509, %v506, %v498
        %v515 = vsel %vm509, %v508, %v500
        %v516 = vmul.f32 %v514, %v393
        %v517 = vmul.f32 %v512, %v397
        %v518 = vmul.f32 %v510, %v401
        %v519 = vmul.f32 %v515, %v393
        %v520 = vmul.f32 %v513, %v397
        %v521 = vmul.f32 %v511, %v401
        %522 = vst [vmem:[#allocation2 + $0x90] sm:$0xff] %v516
        %523 = vst [vmem:[#allocation2 + $0x98] sm:$0xff] %v517
        %524 = vst [vmem:[#allocation2 + $0xa0] sm:$0xff] %v518
        %525 = vst [vmem:[#allocation2 + $0xa8] sm:$0xff] %v519
        %526 = vst [vmem:[#allocation2 + $0xb0] sm:$0xff] %v520
        %527 = vst [vmem:[#allocation2 + $0xb8] sm:$0xff] %v521
        %528 = vst [vmem:[#allocation2 + $0xc0] sm:$0xff] %v346
        %529 = vst [vmem:[#allocation2 + $0xc8] sm:$0xff] %v347
        %530 = vst [vmem:[#allocation2 + $0xd0] sm:$0xff] %v348
        %531 = vst [vmem:[#allocation2 + $0xd8] sm:$0xff] %v349
        %532 = vst [vmem:[#allocation2 + $0xe0] sm:$0xff] %v350
        %533 = vst [vmem:[#allocation2 + $0xe8] sm:$0xff] %v351
        %534 = vrot.lane.b32.xlu0 %v346, 127
        %v535 = vpop.permute.xlu0 %534
        %536 = vrot.lane.b32.xlu0 %v349, 127
        %v537 = vpop.permute.xlu0 %536
        %538 = vrot.lane.b32.xlu0 %v347, 127
        %v539 = vpop.permute.xlu0 %538
        %540 = vrot.lane.b32.xlu0 %v350, 127
        %v541 = vpop.permute.xlu0 %540
        %542 = vrot.lane.b32.xlu0 %v348, 127
        %v543 = vpop.permute.xlu0 %542
        %544 = vrot.lane.b32.xlu0 %v351, 127
        %v545 = vpop.permute.xlu0 %544
        %vm546 = vcmp.lt.s32.totalorder %v366, 127
        %v547 = vsel %vm546, %v539, %v543
        %v548 = vsel %vm546, %v541, %v545
        %v549 = vsel %vm546, %v535, %v539
        %v550 = vsel %vm546, %v537, %v541
        %v551 = vsel %vm546, %v543, %v535
        %v552 = vsel %vm546, %v545, %v537
        %v553 = vmul.f32 %v549, %v476
        %v554 = vmul.f32 %v547, %v480
        %v555 = vmul.f32 %v551, %v484
        %v556 = vmul.f32 %v550, %v476
        %v557 = vmul.f32 %v548, %v480
        %v558 = vmul.f32 %v552, %v484
        %559 = vst [vmem:[#allocation2 + $0xf0] sm:$0xff] %v553
        %560 = vst [vmem:[#allocation2 + $0xf8] sm:$0xff] %v554
        %561 = vst [vmem:[#allocation2 + $0x100] sm:$0xff] %v555
        %562 = vst [vmem:[#allocation2 + $0x108] sm:$0xff] %v556
        %563 = vst [vmem:[#allocation2 + $0x110] sm:$0xff] %v557
        %564 = vst [vmem:[#allocation2 + $0x118] sm:$0xff] %v558
        %565 = vrot.lane.b32.xlu0 %v346, 97
        %v566 = vpop.permute.xlu0 %565
        %567 = vrot.lane.b32.xlu0 %v349, 97
        %v568 = vpop.permute.xlu0 %567
        %569 = vrot.lane.b32.xlu0 %v347, 97
        %v570 = vpop.permute.xlu0 %569
        %571 = vrot.lane.b32.xlu0 %v350, 97
        %v572 = vpop.permute.xlu0 %571
        %573 = vrot.lane.b32.xlu0 %v348, 97
        %v574 = vpop.permute.xlu0 %573
        %575 = vrot.lane.b32.xlu0 %v351, 97
        %v576 = vpop.permute.xlu0 %575
        %vm577 = vcmp.lt.s32.totalorder %v366, 97
        %v578 = vsel %vm577, %v570, %v574
        %v579 = vsel %vm577, %v572, %v576
        %v580 = vsel %vm577, %v566, %v570
        %v581 = vsel %vm577, %v568, %v572
        %v582 = vsel %vm577, %v574, %v566
        %v583 = vsel %vm577, %v576, %v568
        %v584 = vmul.f32 %v580, %v393
        %v585 = vmul.f32 %v578, %v397
        %v586 = vmul.f32 %v582, %v401
        %v587 = vmul.f32 %v581, %v393
        %v588 = vmul.f32 %v579, %v397
        %v589 = vmul.f32 %v583, %v401
        %590 = vst [vmem:[#allocation2 + $0x120] sm:$0xff] %v584
        %591 = vst [vmem:[#allocation2 + $0x128] sm:$0xff] %v585
        %592 = vst [vmem:[#allocation2 + $0x130] sm:$0xff] %v586
        %593 = vst [vmem:[#allocation2 + $0x138] sm:$0xff] %v587
        %594 = vst [vmem:[#allocation2 + $0x140] sm:$0xff] %v588
        %595 = vst [vmem:[#allocation2 + $0x148] sm:$0xff] %v589
        %596 = vrot.lane.b32.xlu0 %v346, 96
        %v597 = vpop.permute.xlu0 %596
        %598 = vrot.lane.b32.xlu0 %v349, 96
        %v599 = vpop.permute.xlu0 %598
        %600 = vrot.lane.b32.xlu0 %v347, 96
        %v601 = vpop.permute.xlu0 %600
        %602 = vrot.lane.b32.xlu0 %v350, 96
        %v603 = vpop.permute.xlu0 %602
        %604 = vrot.lane.b32.xlu0 %v348, 96
        %v605 = vpop.permute.xlu0 %604
        %606 = vrot.lane.b32.xlu0 %v351, 96
        %v607 = vpop.permute.xlu0 %606
        %vm608 = vcmp.lt.s32.totalorder %v366, 96
        %v609 = vsel %vm608, %v601, %v605
        %v610 = vsel %vm608, %v603, %v607
        %v611 = vsel %vm608, %v597, %v601
        %v612 = vsel %vm608, %v599, %v603
        %v613 = vsel %vm608, %v605, %v597
        %v614 = vsel %vm608, %v607, %v599
        %615 = vst [vmem:[#allocation2 + $0x150] sm:$0xff] %v611
        %616 = vst [vmem:[#allocation2 + $0x158] sm:$0xff] %v609
        %617 = vst [vmem:[#allocation2 + $0x160] sm:$0xff] %v613
        %618 = vst [vmem:[#allocation2 + $0x168] sm:$0xff] %v612
        %619 = vst [vmem:[#allocation2 + $0x170] sm:$0xff] %v610
        %620 = vst [vmem:[#allocation2 + $0x178] sm:$0xff] %v614
        %621 = vrot.lane.b32.xlu0 %v346, 95
        %v622 = vpop.permute.xlu0 %621
        %623 = vrot.lane.b32.xlu0 %v349, 95
        %v624 = vpop.permute.xlu0 %623
        %625 = vrot.lane.b32.xlu0 %v347, 95
        %v626 = vpop.permute.xlu0 %625
        %627 = vrot.lane.b32.xlu0 %v350, 95
        %v628 = vpop.permute.xlu0 %627
        %629 = vrot.lane.b32.xlu0 %v348, 95
        %v630 = vpop.permute.xlu0 %629
        %631 = vrot.lane.b32.xlu0 %v351, 95
        %v632 = vpop.permute.xlu0 %631
        %vm633 = vcmp.lt.s32.totalorder %v366, 95
        %v634 = vsel %vm633, %v626, %v630
        %v635 = vsel %vm633, %v628, %v632
        %v636 = vsel %vm633, %v622, %v626
        %v637 = vsel %vm633, %v624, %v628
        %v638 = vsel %vm633, %v630, %v622
        %v639 = vsel %vm633, %v632, %v624
        %v640 = vmul.f32 %v636, %v476
        %v641 = vmul.f32 %v634, %v480
        %v642 = vmul.f32 %v638, %v484
        %v643 = vmul.f32 %v637, %v476
        %v644 = vmul.f32 %v635, %v480
        %v645 = vmul.f32 %v639, %v484
        %646 = vst [vmem:[#allocation2 + $0x180] sm:$0xff] %v640
        %647 = vst [vmem:[#allocation2 + $0x188] sm:$0xff] %v641
        %648 = vst [vmem:[#allocation2 + $0x190] sm:$0xff] %v642
        %649 = vst [vmem:[#allocation2 + $0x198] sm:$0xff] %v643
        %650 = vst [vmem:[#allocation2 + $0x1a0] sm:$0xff] %v644
        %651 = vst [vmem:[#allocation2 + $0x1a8] sm:$0xff] %v645
        %v652 = vld [vmem:[%s1] sm:$0xff]
        %v653 = vld [vmem:[%s1 + $0x8] sm:$0xff]
        %v654 = vld [vmem:[%s1 + $0x10] sm:$0xff]
        %v655 = vld [vmem:[%s1 + $0x18] sm:$0xff]
        %v656 = vld [vmem:[#allocation2] sm:$0xff]
        %v657 = vld [vmem:[#allocation2 + $0x8] sm:$0xff]
        %v658 = vld [vmem:[#allocation2 + $0x10] sm:$0xff]
        %v659 = vld [vmem:[#allocation2 + $0x18] sm:$0xff]
        %v660 = vld [vmem:[#allocation2 + $0x20] sm:$0xff]
        %v661 = vld [vmem:[#allocation2 + $0x28] sm:$0xff]
        %v662 = vld [vmem:[#allocation2 + $0x30] sm:$0xff]
        %v663 = vld [vmem:[#allocation2 + $0x38] sm:$0xff]
        %v664 = vld [vmem:[#allocation2 + $0x40] sm:$0xff]
        %v665 = vld [vmem:[#allocation2 + $0x48] sm:$0xff]
        %v666 = vld [vmem:[#allocation2 + $0x50] sm:$0xff]
        %v667 = vld [vmem:[#allocation2 + $0x58] sm:$0xff]
        %v668 = vld [vmem:[#allocation2 + $0x60] sm:$0xff]
        %v669 = vld [vmem:[#allocation2 + $0x68] sm:$0xff]
        %v670 = vld [vmem:[#allocation2 + $0x70] sm:$0xff]
        %v671 = vld [vmem:[#allocation2 + $0x78] sm:$0xff]
        %v672 = vld [vmem:[#allocation2 + $0x80] sm:$0xff]
        %v673 = vld [vmem:[#allocation2 + $0x88] sm:$0xff]
        %v674 = vld [vmem:[#allocation2 + $0x90] sm:$0xff]
        %v675 = vld [vmem:[#allocation2 + $0x98] sm:$0xff]
        %v676 = vld [vmem:[#allocation2 + $0xa0] sm:$0xff]
        %v677 = vld [vmem:[#allocation2 + $0xa8] sm:$0xff]
        %v678 = vld [vmem:[#allocation2 + $0xb0] sm:$0xff]
        %v679 = vld [vmem:[#allocation2 + $0xb8] sm:$0xff]
        %v680 = vld [vmem:[#allocation2 + $0xc0] sm:$0xff]
        %v681 = vld [vmem:[#allocation2 + $0xc8] sm:$0xff]
        %v682 = vld [vmem:[#allocation2 + $0xd0] sm:$0xff]
        %v683 = vld [vmem:[#allocation2 + $0xd8] sm:$0xff]
        %v684 = vld [vmem:[#allocation2 + $0xe0] sm:$0xff]
        %v685 = vld [vmem:[#allocation2 + $0xe8] sm:$0xff]
        %v686 = vld [vmem:[#allocation2 + $0xf0] sm:$0xff]
        %v687 = vld [vmem:[#allocation2 + $0xf8] sm:$0xff]
        %v688 = vld [vmem:[#allocation2 + $0x100] sm:$0xff]
        %v689 = vld [vmem:[#allocation2 + $0x108] sm:$0xff]
        %v690 = vld [vmem:[#allocation2 + $0x110] sm:$0xff]
        %v691 = vld [vmem:[#allocation2 + $0x118] sm:$0xff]
        %v692 = vld [vmem:[#allocation2 + $0x120] sm:$0xff]
        %v693 = vld [vmem:[#allocation2 + $0x128] sm:$0xff]
        %v694 = vld [vmem:[#allocation2 + $0x130] sm:$0xff]
        %v695 = vld [vmem:[#allocation2 + $0x138] sm:$0xff]
        %v696 = vld [vmem:[#allocation2 + $0x140] sm:$0xff]
        %v697 = vld [vmem:[#allocation2 + $0x148] sm:$0xff]
        %v698 = vld [vmem:[#allocation2 + $0x150] sm:$0xff]
        %v699 = vld [vmem:[#allocation2 + $0x158] sm:$0xff]
        %v700 = vld [vmem:[#allocation2 + $0x160] sm:$0xff]
        %v701 = vld [vmem:[#allocation2 + $0x168] sm:$0xff]
        %v702 = vld [vmem:[#allocation2 + $0x170] sm:$0xff]
        %v703 = vld [vmem:[#allocation2 + $0x178] sm:$0xff]
        %v704 = vld [vmem:[#allocation2 + $0x180] sm:$0xff]
        %v705 = vld [vmem:[#allocation2 + $0x188] sm:$0xff]
        %v706 = vld [vmem:[#allocation2 + $0x190] sm:$0xff]
        %v707 = vld [vmem:[#allocation2 + $0x198] sm:$0xff]
        %v708 = vld [vmem:[#allocation2 + $0x1a0] sm:$0xff]
        %v709 = vld [vmem:[#allocation2 + $0x1a8] sm:$0xff]
        %vm710 = vcmask 130048
        %v712 = vsel %vm710, %v653, 0
        %v715 = vsel %vm710, %v655, 0
        %717 = vmatprep.subr.mxu0 %v702
        %718 = vmatpush1.msra.mxu0 %v701
        %719 = vmatprep.subr.mxu0 %v699
        %720 = vmatpush1.msra.mxu0 %v698
        %721 = vmatprep.subr.mxu0 %v696
        %722 = vmatpush1.msra.mxu0 %v695
        %723 = vmatprep.subr.mxu0 %v693
        %724 = vmatpush1.msra.mxu0 %v692
        %725 = vmatprep.subr.mxu0 %v690
        %726 = vmatpush1.msra.mxu0 %v689
        %727 = vmatprep.subr.mxu0 %v687
        %728 = vmatpush1.msra.mxu0 %v686
        %729 = vmatprep.subr.mxu0 %v684
        %730 = vmatpush1.msra.mxu0 %v683
        %731 = vmatprep.subr.mxu0 %v681
        %732 = vmatpush1.msra.mxu0 %v680
        %733 = vmatprep.subr.mxu0 %v678
        %734 = vmatpush1.msra.mxu0 %v677
        %735 = vmatprep.subr.mxu0 %v675
        %736 = vmatpush1.msra.mxu0 %v674
        %737 = vmatprep.subr.mxu0 %v672
        %738 = vmatpush1.msra.mxu0 %v671
        %739 = vmatprep.subr.mxu0 %v669
        %740 = vmatpush1.msra.mxu0 %v668
        %741 = vmatprep.subr.mxu0 %v666
        %742 = vmatpush1.msra.mxu0 %v665
        %743 = vmatprep.subr.mxu0 %v663
        %744 = vmatpush1.msra.mxu0 %v662
        %745 = vmatprep.subr.mxu0 %v660
        %746 = vmatpush1.msra.mxu0 %v659
        %747 = vmatprep.subr.mxu0 %v657
        %748 = vmatpush1.msra.mxu0 %v656
        %749 = vmatprep.subr.mxu0 0.0
        %750 = vmatpush2.msra.mxu0 0.0
        %751 = vmatprep.subr.mxu0 0.0
        %752 = vmatpush2.msra.mxu0 0.0
        %753 = vmatprep.subr.mxu0 0.0
        %754 = vmatpush2.msra.mxu0 0.0
        %755 = vmatprep.subr.mxu0 0.0
        %756 = vmatpush2.msra.mxu0 0.0
        %757 = vmatprep.subr.mxu0 0.0
        %758 = vmatpush2.msra.mxu0 0.0
        %759 = vmatprep.subr.mxu0 0.0
        %760 = vmatpush2.msra.mxu0 0.0
        %761 = vmatprep.subr.mxu0 0.0
        %762 = vmatpush2.msra.mxu0 0.0
        %763 = vmatprep.subr.mxu0 0.0
        %764 = vmatpush2.msra.mxu0 0.0
        %765 = vmatprep.subr.mxu0 0.0
        %766 = vmatpush2.msra.mxu0 0.0
        %767 = vmatprep.subr.mxu0 0.0
        %768 = vmatpush2.msra.mxu0 0.0
        %769 = vmatprep.subr.mxu0 0.0
        %770 = vmatpush2.msra.mxu0 0.0
        %771 = vmatprep.subr.mxu0 0.0
        %772 = vmatpush2.msra.mxu0 0.0
        %773 = vmatprep.subr.mxu0 0.0
        %774 = vmatpush2.msra.mxu0 0.0
        %775 = vmatprep.subr.mxu0 0.0
        %776 = vmatpush2.msra.mxu0 0.0
        %777 = vmatprep.subr.mxu0 %v708
        %778 = vmatpush2.msra.mxu0 %v707
        %779 = vmatprep.subr.mxu0 %v705
        %780 = vmatpush2.msra.mxu0 %v704
        %781 = vmatprep.mubr.f32.mxu0 %v712
        %782 = vmatmul.mubr.f32.gmra.mxu0 %v652
        %v783 = vpop.f32.mrf.mxu0
        %v784 = vadd.f32 0.0, %v783
        %v785 = vpop.f32.mrf.mxu0
        %v786 = vadd.f32 0.0, %v785
        %787 = vmatprep.mubr.f32.mxu0 %v715
        %788 = vmatmul.mubr.f32.gmra.mxu0 %v654
        %v789 = vpop.f32.mrf.mxu0
        %v790 = vadd.f32 0.0, %v789
        %v791 = vpop.f32.mrf.mxu0
        %v792 = vadd.f32 0.0, %v791
        %793 = vdwg.mxu0
        %794 = vmatprep.subr.mxu0 0.0
        %795 = vmatpush1.msra.mxu0 %v703
        %796 = vmatprep.subr.mxu0 0.0
        %797 = vmatpush1.msra.mxu0 %v700
        %798 = vmatprep.subr.mxu0 0.0
        %799 = vmatpush1.msra.mxu0 %v697
        %800 = vmatprep.subr.mxu0 0.0
        %801 = vmatpush1.msra.mxu0 %v694
        %802 = vmatprep.subr.mxu0 0.0
        %803 = vmatpush1.msra.mxu0 %v691
        %804 = vmatprep.subr.mxu0 0.0
        %805 = vmatpush1.msra.mxu0 %v688
        %806 = vmatprep.subr.mxu0 0.0
        %807 = vmatpush1.msra.mxu0 %v685
        %808 = vmatprep.subr.mxu0 0.0
        %809 = vmatpush1.msra.mxu0 %v682
        %810 = vmatprep.subr.mxu0 0.0
        %811 = vmatpush1.msra.mxu0 %v679
        %812 = vmatprep.subr.mxu0 0.0
        %813 = vmatpush1.msra.mxu0 %v676
        %814 = vmatprep.subr.mxu0 0.0
        %815 = vmatpush1.msra.mxu0 %v673
        %816 = vmatprep.subr.mxu0 0.0
        %817 = vmatpush1.msra.mxu0 %v670
        %818 = vmatprep.subr.mxu0 0.0
        %819 = vmatpush1.msra.mxu0 %v667
        %820 = vmatprep.subr.mxu0 0.0
        %821 = vmatpush1.msra.mxu0 %v664
        %822 = vmatprep.subr.mxu0 0.0
        %823 = vmatpush1.msra.mxu0 %v661
        %824 = vmatprep.subr.mxu0 0.0
        %825 = vmatpush1.msra.mxu0 %v658
        %826 = vmatprep.subr.mxu0 0.0
        %827 = vmatpush2.msra.mxu0 0.0
        %828 = vmatprep.subr.mxu0 0.0
        %829 = vmatpush2.msra.mxu0 0.0
        %830 = vmatprep.subr.mxu0 0.0
        %831 = vmatpush2.msra.mxu0 0.0
        %832 = vmatprep.subr.mxu0 0.0
        %833 = vmatpush2.msra.mxu0 0.0
        %834 = vmatprep.subr.mxu0 0.0
        %835 = vmatpush2.msra.mxu0 0.0
        %836 = vmatprep.subr.mxu0 0.0
        %837 = vmatpush2.msra.mxu0 0.0
        %838 = vmatprep.subr.mxu0 0.0
        %839 = vmatpush2.msra.mxu0 0.0
        %840 = vmatprep.subr.mxu0 0.0
        %841 = vmatpush2.msra.mxu0 0.0
        %842 = vmatprep.subr.mxu0 0.0
        %843 = vmatpush2.msra.mxu0 0.0
        %844 = vmatprep.subr.mxu0 0.0
        %845 = vmatpush2.msra.mxu0 0.0
        %846 = vmatprep.subr.mxu0 0.0
        %847 = vmatpush2.msra.mxu0 0.0
        %848 = vmatprep.subr.mxu0 0.0
        %849 = vmatpush2.msra.mxu0 0.0
        %850 = vmatprep.subr.mxu0 0.0
        %851 = vmatpush2.msra.mxu0 0.0
        %852 = vmatprep.subr.mxu0 0.0
        %853 = vmatpush2.msra.mxu0 0.0
        %854 = vmatprep.subr.mxu0 0.0
        %855 = vmatpush2.msra.mxu0 %v709
        %856 = vmatprep.subr.mxu0 0.0
        %857 = vmatpush2.msra.mxu0 %v706
        %858 = vmatprep.mubr.f32.mxu0 %v712
        %859 = vmatmul.mubr.f32.gmra.mxu0 %v652
        %v860 = vpop.f32.mrf.mxu0
        %v861 = vadd.f32 0.0, %v860
        %v862 = vpop.f32.mrf.mxu0
        %863 = vmatprep.mubr.f32.mxu0 %v715
        %864 = vmatmul.mubr.f32.gmra.mxu0 %v654
        %v865 = vpop.f32.mrf.mxu0
        %v866 = vadd.f32 0.0, %v865
        %v867 = vpop.f32.mrf.mxu0
        %868 = vdwg.mxu0
        %v869 = vld [vmem:[%s5] sm:$0xff]
        %v870 = vld [vmem:[%s5 + $0x8] sm:$0xff]
        %872 = vset.pattern.permute.xlu0 0
        %873 = vperm.xlu0 %872, %v869
        %v874 = vpop.permute.xlu0 %873
        %877 = vset.pattern.permute.xlu0 0
        %878 = vperm.xlu0 %877, %v870
        %v879 = vpop.permute.xlu0 %878
        %v881 = vadd.f32 %v784, %v874
        %v882 = vadd.f32 %v786, %v874
        %v883 = vadd.f32 %v861, %v874
        %v884 = vadd.f32 %v790, %v879
        %v885 = vadd.f32 %v792, %v879
        %v886 = vadd.f32 %v866, %v879
        %v887 = vmax.f32 %v881, 0.0
        %v888 = vmax.f32 %v882, 0.0
        %v889 = vmax.f32 %v883, 0.0
        %v890 = vmax.f32 %v884, 0.0
        %v891 = vmax.f32 %v885, 0.0
        %v892 = vmax.f32 %v886, 0.0
        %v893 = vld [vmem:[%s344] sm:$0x7]
        %v895 = vlaneseq
        %v896 = vshrl.u32 %v895, 7
        %v897 = vsub.s32 0, %v896
        %v898 = vrot.slane %v893, %v897
        %v899 = vlaneseq
        %v900 = vshrl.u32 %v899, 7
        %v901 = vsub.s32 1, %v900
        %v902 = vrot.slane %v893, %v901
        %v903 = vlaneseq
        %v904 = vshrl.u32 %v903, 7
        %v905 = vsub.s32 2, %v904
        %v906 = vrot.slane %v893, %v905
        %v910 = vmul.f32 %v887, %v898
        %v911 = vmul.f32 %v888, %v902
        %v912 = vmul.f32 %v889, %v906
        %v913 = vmul.f32 %v890, %v898
        %v914 = vmul.f32 %v891, %v902
        %v915 = vmul.f32 %v892, %v906
        %916 = vrot.lane.b32.xlu0 %v910, 33
        %v917 = vpop.permute.xlu0 %916
        %918 = vrot.lane.b32.xlu0 %v913, 33
        %v919 = vpop.permute.xlu0 %918
        %920 = vrot.lane.b32.xlu0 %v911, 33
        %v921 = vpop.permute.xlu0 %920
        %922 = vrot.lane.b32.xlu0 %v914, 33
        %v923 = vpop.permute.xlu0 %922
        %924 = vrot.lane.b32.xlu0 %v912, 33
        %v925 = vpop.permute.xlu0 %924
        %926 = vrot.lane.b32.xlu0 %v915, 33
        %v927 = vpop.permute.xlu0 %926
        %v928 = vsel %vm367, %v921, %v925
        %v929 = vsel %vm367, %v923, %v927
        %v930 = vsel %vm367, %v917, %v921
        %v931 = vsel %vm367, %v919, %v923
        %v932 = vsel %vm367, %v925, %v917
        %v933 = vsel %vm367, %v927, %v919
        %v934 = vmul.f32 %v932, %v393
        %v935 = vmul.f32 %v930, %v397
        %v936 = vmul.f32 %v928, %v401
        %v937 = vmul.f32 %v933, %v393
        %v938 = vmul.f32 %v931, %v397
        %v939 = vmul.f32 %v929, %v401
        %940 = vst [vmem:[#allocation3] sm:$0xff] %v934
        %941 = vst [vmem:[#allocation3 + $0x8] sm:$0xff] %v935
        %942 = vst [vmem:[#allocation3 + $0x10] sm:$0xff] %v936
        %943 = vst [vmem:[#allocation3 + $0x18] sm:$0xff] %v937
        %944 = vst [vmem:[#allocation3 + $0x20] sm:$0xff] %v938
        %945 = vst [vmem:[#allocation3 + $0x28] sm:$0xff] %v939
        %946 = vrot.lane.b32.xlu0 %v910, 32
        %v947 = vpop.permute.xlu0 %946
        %948 = vrot.lane.b32.xlu0 %v913, 32
        %v949 = vpop.permute.xlu0 %948
        %950 = vrot.lane.b32.xlu0 %v911, 32
        %v951 = vpop.permute.xlu0 %950
        %952 = vrot.lane.b32.xlu0 %v914, 32
        %v953 = vpop.permute.xlu0 %952
        %954 = vrot.lane.b32.xlu0 %v912, 32
        %v955 = vpop.permute.xlu0 %954
        %956 = vrot.lane.b32.xlu0 %v915, 32
        %v957 = vpop.permute.xlu0 %956
        %v958 = vsel %vm426, %v951, %v955
        %v959 = vsel %vm426, %v953, %v957
        %v960 = vsel %vm426, %v947, %v951
        %v961 = vsel %vm426, %v949, %v953
        %v962 = vsel %vm426, %v955, %v947
        %v963 = vsel %vm426, %v957, %v949
        %964 = vst [vmem:[#allocation3 + $0x30] sm:$0xff] %v962
        %965 = vst [vmem:[#allocation3 + $0x38] sm:$0xff] %v960
        %966 = vst [vmem:[#allocation3 + $0x40] sm:$0xff] %v958
        %967 = vst [vmem:[#allocation3 + $0x48] sm:$0xff] %v963
        %968 = vst [vmem:[#allocation3 + $0x50] sm:$0xff] %v961
        %969 = vst [vmem:[#allocation3 + $0x58] sm:$0xff] %v959
        %970 = vrot.lane.b32.xlu0 %v910, 31
        %v971 = vpop.permute.xlu0 %970
        %972 = vrot.lane.b32.xlu0 %v913, 31
        %v973 = vpop.permute.xlu0 %972
        %974 = vrot.lane.b32.xlu0 %v911, 31
        %v975 = vpop.permute.xlu0 %974
        %976 = vrot.lane.b32.xlu0 %v914, 31
        %v977 = vpop.permute.xlu0 %976
        %978 = vrot.lane.b32.xlu0 %v912, 31
        %v979 = vpop.permute.xlu0 %978
        %980 = vrot.lane.b32.xlu0 %v915, 31
        %v981 = vpop.permute.xlu0 %980
        %v982 = vsel %vm451, %v975, %v979
        %v983 = vsel %vm451, %v977, %v981
        %v984 = vsel %vm451, %v971, %v975
        %v985 = vsel %vm451, %v973, %v977
        %v986 = vsel %vm451, %v979, %v971
        %v987 = vsel %vm451, %v981, %v973
        %v988 = vmul.f32 %v986, %v476
        %v989 = vmul.f32 %v984, %v480
        %v990 = vmul.f32 %v982, %v484
        %v991 = vmul.f32 %v987, %v476
        %v992 = vmul.f32 %v985, %v480
        %v993 = vmul.f32 %v983, %v484
        %994 = vst [vmem:[#allocation3 + $0x60] sm:$0xff] %v988
        %995 = vst [vmem:[#allocation3 + $0x68] sm:$0xff] %v989
        %996 = vst [vmem:[#allocation3 + $0x70] sm:$0xff] %v990
        %997 = vst [vmem:[#allocation3 + $0x78] sm:$0xff] %v991
        %998 = vst [vmem:[#allocation3 + $0x80] sm:$0xff] %v992
        %999 = vst [vmem:[#allocation3 + $0x88] sm:$0xff] %v993
        %1000 = vrot.lane.b32.xlu0 %v910, 1
        %v1001 = vpop.permute.xlu0 %1000
        %1002 = vrot.lane.b32.xlu0 %v913, 1
        %v1003 = vpop.permute.xlu0 %1002
        %1004 = vrot.lane.b32.xlu0 %v911, 1
        %v1005 = vpop.permute.xlu0 %1004
        %1006 = vrot.lane.b32.xlu0 %v914, 1
        %v1007 = vpop.permute.xlu0 %1006
        %1008 = vrot.lane.b32.xlu0 %v912, 1
        %v1009 = vpop.permute.xlu0 %1008
        %1010 = vrot.lane.b32.xlu0 %v915, 1
        %v1011 = vpop.permute.xlu0 %1010
        %v1012 = vsel %vm509, %v1005, %v1009
        %v1013 = vsel %vm509, %v1007, %v1011
        %v1014 = vsel %vm509, %v1001, %v1005
        %v1015 = vsel %vm509, %v1003, %v1007
        %v1016 = vsel %vm509, %v1009, %v1001
        %v1017 = vsel %vm509, %v1011, %v1003
        %v1018 = vmul.f32 %v1016, %v393
        %v1019 = vmul.f32 %v1014, %v397
        %v1020 = vmul.f32 %v1012, %v401
        %v1021 = vmul.f32 %v1017, %v393
        %v1022 = vmul.f32 %v1015, %v397
        %v1023 = vmul.f32 %v1013, %v401
        %1024 = vst [vmem:[#allocation3 + $0x90] sm:$0xff] %v1018
        %1025 = vst [vmem:[#allocation3 + $0x98] sm:$0xff] %v1019
        %1026 = vst [vmem:[#allocation3 + $0xa0] sm:$0xff] %v1020
        %1027 = vst [vmem:[#allocation3 + $0xa8] sm:$0xff] %v1021
        %1028 = vst [vmem:[#allocation3 + $0xb0] sm:$0xff] %v1022
        %1029 = vst [vmem:[#allocation3 + $0xb8] sm:$0xff] %v1023
        %1030 = vst [vmem:[#allocation3 + $0xc0] sm:$0xff] %v910
        %1031 = vst [vmem:[#allocation3 + $0xc8] sm:$0xff] %v911
        %1032 = vst [vmem:[#allocation3 + $0xd0] sm:$0xff] %v912
        %1033 = vst [vmem:[#allocation3 + $0xd8] sm:$0xff] %v913
        %1034 = vst [vmem:[#allocation3 + $0xe0] sm:$0xff] %v914
        %1035 = vst [vmem:[#allocation3 + $0xe8] sm:$0xff] %v915
        %1036 = vrot.lane.b32.xlu0 %v910, 127
        %v1037 = vpop.permute.xlu0 %1036
        %1038 = vrot.lane.b32.xlu0 %v913, 127
        %v1039 = vpop.permute.xlu0 %1038
        %1040 = vrot.lane.b32.xlu0 %v911, 127
        %v1041 = vpop.permute.xlu0 %1040
        %1042 = vrot.lane.b32.xlu0 %v914, 127
        %v1043 = vpop.permute.xlu0 %1042
        %1044 = vrot.lane.b32.xlu0 %v912, 127
        %v1045 = vpop.permute.xlu0 %1044
        %1046 = vrot.lane.b32.xlu0 %v915, 127
        %v1047 = vpop.permute.xlu0 %1046
        %v1048 = vsel %vm546, %v1041, %v1045
        %v1049 = vsel %vm546, %v1043, %v1047
        %v1050 = vsel %vm546, %v1037, %v1041
        %v1051 = vsel %vm546, %v1039, %v1043
        %v1052 = vsel %vm546, %v1045, %v1037
        %v1053 = vsel %vm546, %v1047, %v1039
        %v1054 = vmul.f32 %v1050, %v476
        %v1055 = vmul.f32 %v1048, %v480
        %v1056 = vmul.f32 %v1052, %v484
        %v1057 = vmul.f32 %v1051, %v476
        %v1058 = vmul.f32 %v1049, %v480
        %v1059 = vmul.f32 %v1053, %v484
        %1060 = vst [vmem:[#allocation3 + $0xf0] sm:$0xff] %v1054
        %1061 = vst [vmem:[#allocation3 + $0xf8] sm:$0xff] %v1055
        %1062 = vst [vmem:[#allocation3 + $0x100] sm:$0xff] %v1056
        %1063 = vst [vmem:[#allocation3 + $0x108] sm:$0xff] %v1057
        %1064 = vst [vmem:[#allocation3 + $0x110] sm:$0xff] %v1058
        %1065 = vst [vmem:[#allocation3 + $0x118] sm:$0xff] %v1059
        %1066 = vrot.lane.b32.xlu0 %v910, 97
        %v1067 = vpop.permute.xlu0 %1066
        %1068 = vrot.lane.b32.xlu0 %v913, 97
        %v1069 = vpop.permute.xlu0 %1068
        %1070 = vrot.lane.b32.xlu0 %v911, 97
        %v1071 = vpop.permute.xlu0 %1070
        %1072 = vrot.lane.b32.xlu0 %v914, 97
        %v1073 = vpop.permute.xlu0 %1072
        %1074 = vrot.lane.b32.xlu0 %v912, 97
        %v1075 = vpop.permute.xlu0 %1074
        %1076 = vrot.lane.b32.xlu0 %v915, 97
        %v1077 = vpop.permute.xlu0 %1076
        %v1078 = vsel %vm577, %v1071, %v1075
        %v1079 = vsel %vm577, %v1073, %v1077
        %v1080 = vsel %vm577, %v1067, %v1071
        %v1081 = vsel %vm577, %v1069, %v1073
        %v1082 = vsel %vm577, %v1075, %v1067
        %v1083 = vsel %vm577, %v1077, %v1069
        %v1084 = vmul.f32 %v1080, %v393
        %v1085 = vmul.f32 %v1078, %v397
        %v1086 = vmul.f32 %v1082, %v401
        %v1087 = vmul.f32 %v1081, %v393
        %v1088 = vmul.f32 %v1079, %v397
        %v1089 = vmul.f32 %v1083, %v401
        %1090 = vst [vmem:[#allocation3 + $0x120] sm:$0xff] %v1084
        %1091 = vst [vmem:[#allocation3 + $0x128] sm:$0xff] %v1085
        %1092 = vst [vmem:[#allocation3 + $0x130] sm:$0xff] %v1086
        %1093 = vst [vmem:[#allocation3 + $0x138] sm:$0xff] %v1087
        %1094 = vst [vmem:[#allocation3 + $0x140] sm:$0xff] %v1088
        %1095 = vst [vmem:[#allocation3 + $0x148] sm:$0xff] %v1089
        %1096 = vrot.lane.b32.xlu0 %v910, 96
        %v1097 = vpop.permute.xlu0 %1096
        %1098 = vrot.lane.b32.xlu0 %v913, 96
        %v1099 = vpop.permute.xlu0 %1098
        %1100 = vrot.lane.b32.xlu0 %v911, 96
        %v1101 = vpop.permute.xlu0 %1100
        %1102 = vrot.lane.b32.xlu0 %v914, 96
        %v1103 = vpop.permute.xlu0 %1102
        %1104 = vrot.lane.b32.xlu0 %v912, 96
        %v1105 = vpop.permute.xlu0 %1104
        %1106 = vrot.lane.b32.xlu0 %v915, 96
        %v1107 = vpop.permute.xlu0 %1106
        %v1108 = vsel %vm608, %v1101, %v1105
        %v1109 = vsel %vm608, %v1103, %v1107
        %v1110 = vsel %vm608, %v1097, %v1101
        %v1111 = vsel %vm608, %v1099, %v1103
        %v1112 = vsel %vm608, %v1105, %v1097
        %v1113 = vsel %vm608, %v1107, %v1099
        %1114 = vst [vmem:[#allocation3 + $0x150] sm:$0xff] %v1110
        %1115 = vst [vmem:[#allocation3 + $0x158] sm:$0xff] %v1108
        %1116 = vst [vmem:[#allocation3 + $0x160] sm:$0xff] %v1112
        %1117 = vst [vmem:[#allocation3 + $0x168] sm:$0xff] %v1111
        %1118 = vst [vmem:[#allocation3 + $0x170] sm:$0xff] %v1109
        %1119 = vst [vmem:[#allocation3 + $0x178] sm:$0xff] %v1113
        %1120 = vrot.lane.b32.xlu0 %v910, 95
        %v1121 = vpop.permute.xlu0 %1120
        %1122 = vrot.lane.b32.xlu0 %v913, 95
        %v1123 = vpop.permute.xlu0 %1122
        %1124 = vrot.lane.b32.xlu0 %v911, 95
        %v1125 = vpop.permute.xlu0 %1124
        %1126 = vrot.lane.b32.xlu0 %v914, 95
        %v1127 = vpop.permute.xlu0 %1126
        %1128 = vrot.lane.b32.xlu0 %v912, 95
        %v1129 = vpop.permute.xlu0 %1128
        %1130 = vrot.lane.b32.xlu0 %v915, 95
        %v1131 = vpop.permute.xlu0 %1130
        %v1132 = vsel %vm633, %v1125, %v1129
        %v1133 = vsel %vm633, %v1127, %v1131
        %v1134 = vsel %vm633, %v1121, %v1125
        %v1135 = vsel %vm633, %v1123, %v1127
        %v1136 = vsel %vm633, %v1129, %v1121
        %v1137 = vsel %vm633, %v1131, %v1123
        %v1138 = vmul.f32 %v1134, %v476
        %v1139 = vmul.f32 %v1132, %v480
        %v1140 = vmul.f32 %v1136, %v484
        %v1141 = vmul.f32 %v1135, %v476
        %v1142 = vmul.f32 %v1133, %v480
        %v1143 = vmul.f32 %v1137, %v484
        %1144 = vst [vmem:[#allocation3 + $0x180] sm:$0xff] %v1138
        %1145 = vst [vmem:[#allocation3 + $0x188] sm:$0xff] %v1139
        %1146 = vst [vmem:[#allocation3 + $0x190] sm:$0xff] %v1140
        %1147 = vst [vmem:[#allocation3 + $0x198] sm:$0xff] %v1141
        %1148 = vst [vmem:[#allocation3 + $0x1a0] sm:$0xff] %v1142
        %1149 = vst [vmem:[#allocation3 + $0x1a8] sm:$0xff] %v1143
        %v1150 = vld [vmem:[%s1] sm:$0xff]
        %v1151 = vld [vmem:[%s1 + $0x8] sm:$0xff]
        %v1152 = vld [vmem:[%s1 + $0x10] sm:$0xff]
        %v1153 = vld [vmem:[%s1 + $0x18] sm:$0xff]
        %v1154 = vld [vmem:[#allocation3] sm:$0xff]
        %v1155 = vld [vmem:[#allocation3 + $0x8] sm:$0xff]
        %v1156 = vld [vmem:[#allocation3 + $0x10] sm:$0xff]
        %v1157 = vld [vmem:[#allocation3 + $0x18] sm:$0xff]
        %v1158 = vld [vmem:[#allocation3 + $0x20] sm:$0xff]
        %v1159 = vld [vmem:[#allocation3 + $0x28] sm:$0xff]
        %v1160 = vld [vmem:[#allocation3 + $0x30] sm:$0xff]
        %v1161 = vld [vmem:[#allocation3 + $0x38] sm:$0xff]
        %v1162 = vld [vmem:[#allocation3 + $0x40] sm:$0xff]
        %v1163 = vld [vmem:[#allocation3 + $0x48] sm:$0xff]
        %v1164 = vld [vmem:[#allocation3 + $0x50] sm:$0xff]
        %v1165 = vld [vmem:[#allocation3 + $0x58] sm:$0xff]
        %v1166 = vld [vmem:[#allocation3 + $0x60] sm:$0xff]
        %v1167 = vld [vmem:[#allocation3 + $0x68] sm:$0xff]
        %v1168 = vld [vmem:[#allocation3 + $0x70] sm:$0xff]
        %v1169 = vld [vmem:[#allocation3 + $0x78] sm:$0xff]
        %v1170 = vld [vmem:[#allocation3 + $0x80] sm:$0xff]
        %v1171 = vld [vmem:[#allocation3 + $0x88] sm:$0xff]
        %v1172 = vld [vmem:[#allocation3 + $0x90] sm:$0xff]
        %v1173 = vld [vmem:[#allocation3 + $0x98] sm:$0xff]
        %v1174 = vld [vmem:[#allocation3 + $0xa0] sm:$0xff]
        %v1175 = vld [vmem:[#allocation3 + $0xa8] sm:$0xff]
        %v1176 = vld [vmem:[#allocation3 + $0xb0] sm:$0xff]
        %v1177 = vld [vmem:[#allocation3 + $0xb8] sm:$0xff]
        %v1178 = vld [vmem:[#allocation3 + $0xc0] sm:$0xff]
        %v1179 = vld [vmem:[#allocation3 + $0xc8] sm:$0xff]
        %v1180 = vld [vmem:[#allocation3 + $0xd0] sm:$0xff]
        %v1181 = vld [vmem:[#allocation3 + $0xd8] sm:$0xff]
        %v1182 = vld [vmem:[#allocation3 + $0xe0] sm:$0xff]
        %v1183 = vld [vmem:[#allocation3 + $0xe8] sm:$0xff]
        %v1184 = vld [vmem:[#allocation3 + $0xf0] sm:$0xff]
        %v1185 = vld [vmem:[#allocation3 + $0xf8] sm:$0xff]
        %v1186 = vld [vmem:[#allocation3 + $0x100] sm:$0xff]
        %v1187 = vld [vmem:[#allocation3 + $0x108] sm:$0xff]
        %v1188 = vld [vmem:[#allocation3 + $0x110] sm:$0xff]
        %v1189 = vld [vmem:[#allocation3 + $0x118] sm:$0xff]
        %v1190 = vld [vmem:[#allocation3 + $0x120] sm:$0xff]
        %v1191 = vld [vmem:[#allocation3 + $0x128] sm:$0xff]
        %v1192 = vld [vmem:[#allocation3 + $0x130] sm:$0xff]
        %v1193 = vld [vmem:[#allocation3 + $0x138] sm:$0xff]
        %v1194 = vld [vmem:[#allocation3 + $0x140] sm:$0xff]
        %v1195 = vld [vmem:[#allocation3 + $0x148] sm:$0xff]
        %v1196 = vld [vmem:[#allocation3 + $0x150] sm:$0xff]
        %v1197 = vld [vmem:[#allocation3 + $0x158] sm:$0xff]
        %v1198 = vld [vmem:[#allocation3 + $0x160] sm:$0xff]
        %v1199 = vld [vmem:[#allocation3 + $0x168] sm:$0xff]
        %v1200 = vld [vmem:[#allocation3 + $0x170] sm:$0xff]
        %v1201 = vld [vmem:[#allocation3 + $0x178] sm:$0xff]
        %v1202 = vld [vmem:[#allocation3 + $0x180] sm:$0xff]
        %v1203 = vld [vmem:[#allocation3 + $0x188] sm:$0xff]
        %v1204 = vld [vmem:[#allocation3 + $0x190] sm:$0xff]
        %v1205 = vld [vmem:[#allocation3 + $0x198] sm:$0xff]
        %v1206 = vld [vmem:[#allocation3 + $0x1a0] sm:$0xff]
        %v1207 = vld [vmem:[#allocation3 + $0x1a8] sm:$0xff]
        %v1209 = vsel %vm710, %v1151, 0
        %v1212 = vsel %vm710, %v1153, 0
        %1214 = vmatprep.subr.mxu0 %v1200
        %1215 = vmatpush1.msra.mxu0 %v1199
        %1216 = vmatprep.subr.mxu0 %v1197
        %1217 = vmatpush1.msra.mxu0 %v1196
        %1218 = vmatprep.subr.mxu0 %v1194
        %1219 = vmatpush1.msra.mxu0 %v1193
        %1220 = vmatprep.subr.mxu0 %v1191
        %1221 = vmatpush1.msra.mxu0 %v1190
        %1222 = vmatprep.subr.mxu0 %v1188
        %1223 = vmatpush1.msra.mxu0 %v1187
        %1224 = vmatprep.subr.mxu0 %v1185
        %1225 = vmatpush1.msra.mxu0 %v1184
        %1226 = vmatprep.subr.mxu0 %v1182
        %1227 = vmatpush1.msra.mxu0 %v1181
        %1228 = vmatprep.subr.mxu0 %v1179
        %1229 = vmatpush1.msra.mxu0 %v1178
        %1230 = vmatprep.subr.mxu0 %v1176
        %1231 = vmatpush1.msra.mxu0 %v1175
        %1232 = vmatprep.subr.mxu0 %v1173
        %1233 = vmatpush1.msra.mxu0 %v1172
        %1234 = vmatprep.subr.mxu0 %v1170
        %1235 = vmatpush1.msra.mxu0 %v1169
        %1236 = vmatprep.subr.mxu0 %v1167
        %1237 = vmatpush1.msra.mxu0 %v1166
        %1238 = vmatprep.subr.mxu0 %v1164
        %1239 = vmatpush1.msra.mxu0 %v1163
        %1240 = vmatprep.subr.mxu0 %v1161
        %1241 = vmatpush1.msra.mxu0 %v1160
        %1242 = vmatprep.subr.mxu0 %v1158
        %1243 = vmatpush1.msra.mxu0 %v1157
        %1244 = vmatprep.subr.mxu0 %v1155
        %1245 = vmatpush1.msra.mxu0 %v1154
        %1246 = vmatprep.subr.mxu0 0.0
        %1247 = vmatpush2.msra.mxu0 0.0
        %1248 = vmatprep.subr.mxu0 0.0
        %1249 = vmatpush2.msra.mxu0 0.0
        %1250 = vmatprep.subr.mxu0 0.0
        %1251 = vmatpush2.msra.mxu0 0.0
        %1252 = vmatprep.subr.mxu0 0.0
        %1253 = vmatpush2.msra.mxu0 0.0
        %1254 = vmatprep.subr.mxu0 0.0
        %1255 = vmatpush2.msra.mxu0 0.0
        %1256 = vmatprep.subr.mxu0 0.0
        %1257 = vmatpush2.msra.mxu0 0.0
        %1258 = vmatprep.subr.mxu0 0.0
        %1259 = vmatpush2.msra.mxu0 0.0
        %1260 = vmatprep.subr.mxu0 0.0
        %1261 = vmatpush2.msra.mxu0 0.0
        %1262 = vmatprep.subr.mxu0 0.0
        %1263 = vmatpush2.msra.mxu0 0.0
        %1264 = vmatprep.subr.mxu0 0.0
        %1265 = vmatpush2.msra.mxu0 0.0
        %1266 = vmatprep.subr.mxu0 0.0
        %1267 = vmatpush2.msra.mxu0 0.0
        %1268 = vmatprep.subr.mxu0 0.0
        %1269 = vmatpush2.msra.mxu0 0.0
        %1270 = vmatprep.subr.mxu0 0.0
        %1271 = vmatpush2.msra.mxu0 0.0
        %1272 = vmatprep.subr.mxu0 0.0
        %1273 = vmatpush2.msra.mxu0 0.0
        %1274 = vmatprep.subr.mxu0 %v1206
        %1275 = vmatpush2.msra.mxu0 %v1205
        %1276 = vmatprep.subr.mxu0 %v1203
        %1277 = vmatpush2.msra.mxu0 %v1202
        %1278 = vmatprep.mubr.f32.mxu0 %v1209
        %1279 = vmatmul.mubr.f32.gmra.mxu0 %v1150
        %v1280 = vpop.f32.mrf.mxu0
        %v1281 = vadd.f32 0.0, %v1280
        %v1282 = vpop.f32.mrf.mxu0
        %v1283 = vadd.f32 0.0, %v1282
        %1284 = vmatprep.mubr.f32.mxu0 %v1212
        %1285 = vmatmul.mubr.f32.gmra.mxu0 %v1152
        %v1286 = vpop.f32.mrf.mxu0
        %v1287 = vadd.f32 0.0, %v1286
        %v1288 = vpop.f32.mrf.mxu0
        %v1289 = vadd.f32 0.0, %v1288
        %1290 = vdwg.mxu0
        %1291 = vmatprep.subr.mxu0 0.0
        %1292 = vmatpush1.msra.mxu0 %v1201
        %1293 = vmatprep.subr.mxu0 0.0
        %1294 = vmatpush1.msra.mxu0 %v1198
        %1295 = vmatprep.subr.mxu0 0.0
        %1296 = vmatpush1.msra.mxu0 %v1195
        %1297 = vmatprep.subr.mxu0 0.0
        %1298 = vmatpush1.msra.mxu0 %v1192
        %1299 = vmatprep.subr.mxu0 0.0
        %1300 = vmatpush1.msra.mxu0 %v1189
        %1301 = vmatprep.subr.mxu0 0.0
        %1302 = vmatpush1.msra.mxu0 %v1186
        %1303 = vmatprep.subr.mxu0 0.0
        %1304 = vmatpush1.msra.mxu0 %v1183
        %1305 = vmatprep.subr.mxu0 0.0
        %1306 = vmatpush1.msra.mxu0 %v1180
        %1307 = vmatprep.subr.mxu0 0.0
        %1308 = vmatpush1.msra.mxu0 %v1177
        %1309 = vmatprep.subr.mxu0 0.0
        %1310 = vmatpush1.msra.mxu0 %v1174
        %1311 = vmatprep.subr.mxu0 0.0
        %1312 = vmatpush1.msra.mxu0 %v1171
        %1313 = vmatprep.subr.mxu0 0.0
        %1314 = vmatpush1.msra.mxu0 %v1168
        %1315 = vmatprep.subr.mxu0 0.0
        %1316 = vmatpush1.msra.mxu0 %v1165
        %1317 = vmatprep.subr.mxu0 0.0
        %1318 = vmatpush1.msra.mxu0 %v1162
        %1319 = vmatprep.subr.mxu0 0.0
        %1320 = vmatpush1.msra.mxu0 %v1159
        %1321 = vmatprep.subr.mxu0 0.0
        %1322 = vmatpush1.msra.mxu0 %v1156
        %1323 = vmatprep.subr.mxu0 0.0
        %1324 = vmatpush2.msra.mxu0 0.0
        %1325 = vmatprep.subr.mxu0 0.0
        %1326 = vmatpush2.msra.mxu0 0.0
        %1327 = vmatprep.subr.mxu0 0.0
        %1328 = vmatpush2.msra.mxu0 0.0
        %1329 = vmatprep.subr.mxu0 0.0
        %1330 = vmatpush2.msra.mxu0 0.0
        %1331 = vmatprep.subr.mxu0 0.0
        %1332 = vmatpush2.msra.mxu0 0.0
        %1333 = vmatprep.subr.mxu0 0.0
        %1334 = vmatpush2.msra.mxu0 0.0
        %1335 = vmatprep.subr.mxu0 0.0
        %1336 = vmatpush2.msra.mxu0 0.0
        %1337 = vmatprep.subr.mxu0 0.0
        %1338 = vmatpush2.msra.mxu0 0.0
        %1339 = vmatprep.subr.mxu0 0.0
        %1340 = vmatpush2.msra.mxu0 0.0
        %1341 = vmatprep.subr.mxu0 0.0
        %1342 = vmatpush2.msra.mxu0 0.0
        %1343 = vmatprep.subr.mxu0 0.0
        %1344 = vmatpush2.msra.mxu0 0.0
        %1345 = vmatprep.subr.mxu0 0.0
        %1346 = vmatpush2.msra.mxu0 0.0
        %1347 = vmatprep.subr.mxu0 0.0
        %1348 = vmatpush2.msra.mxu0 0.0
        %1349 = vmatprep.subr.mxu0 0.0
        %1350 = vmatpush2.msra.mxu0 0.0
        %1351 = vmatprep.subr.mxu0 0.0
        %1352 = vmatpush2.msra.mxu0 %v1207
        %1353 = vmatprep.subr.mxu0 0.0
        %1354 = vmatpush2.msra.mxu0 %v1204
        %1355 = vmatprep.mubr.f32.mxu0 %v1209
        %1356 = vmatmul.mubr.f32.gmra.mxu0 %v1150
        %v1357 = vpop.f32.mrf.mxu0
        %v1358 = vadd.f32 0.0, %v1357
        %v1359 = vpop.f32.mrf.mxu0
        %1360 = vmatprep.mubr.f32.mxu0 %v1212
        %1361 = vmatmul.mubr.f32.gmra.mxu0 %v1152
        %v1362 = vpop.f32.mrf.mxu0
        %v1363 = vadd.f32 0.0, %v1362
        %v1364 = vpop.f32.mrf.mxu0
        %1365 = vdwg.mxu0
        %v1366 = vadd.f32 %v784, %v1281
        %v1367 = vadd.f32 %v786, %v1283
        %v1368 = vadd.f32 %v861, %v1358
        %v1369 = vadd.f32 %v790, %v1287
        %v1370 = vadd.f32 %v792, %v1289
        %v1371 = vadd.f32 %v866, %v1363
        %v1372 = vld [vmem:[%s6] sm:$0xff]
        %v1373 = vld [vmem:[%s6 + $0x8] sm:$0xff]
        %1375 = vset.pattern.permute.xlu0 0
        %1376 = vperm.xlu0 %1375, %v1372
        %v1377 = vpop.permute.xlu0 %1376
        %1380 = vset.pattern.permute.xlu0 0
        %1381 = vperm.xlu0 %1380, %v1373
        %v1382 = vpop.permute.xlu0 %1381
        %v1384 = vadd.f32 %v1366, %v1377
        %v1385 = vadd.f32 %v1367, %v1377
        %v1386 = vadd.f32 %v1368, %v1377
        %v1387 = vadd.f32 %v1369, %v1382
        %v1388 = vadd.f32 %v1370, %v1382
        %v1389 = vadd.f32 %v1371, %v1382
        %v1390 = vmax.f32 %v1384, 0.0
        %v1391 = vmax.f32 %v1385, 0.0
        %v1392 = vmax.f32 %v1386, 0.0
        %v1393 = vmax.f32 %v1387, 0.0
        %v1394 = vmax.f32 %v1388, 0.0
        %v1395 = vmax.f32 %v1389, 0.0
        %v1396 = vld [vmem:[%s2] sm:$0xff]
        %v1397 = vld [vmem:[%s2 + $0x8] sm:$0xff]
        %v1398 = vld [vmem:[%s7] sm:$0xff]
        %v1399 = vld [vmem:[%s7 + $0x8] sm:$0xff]
        %1401 = vset.pattern.permute.xlu0 0
        %1402 = vperm.xlu0 %1401, %v1398
        %v1403 = vpop.permute.xlu0 %1402
        %1406 = vset.pattern.permute.xlu0 0
        %1407 = vperm.xlu0 %1406, %v1399
        %v1408 = vpop.permute.xlu0 %1407
        %1416 = vrot.lane.b32.xlu0 %v1390, 64
        %v1417 = vpop.permute.xlu0 %1416
        %1418 = vrot.lane.b32.xlu0 %v1391, 64
        %v1419 = vpop.permute.xlu0 %1418
        %1420 = vrot.lane.b32.xlu0 %v1392, 64
        %v1421 = vpop.permute.xlu0 %1420
        %1422 = vrot.lane.b32.xlu0 %v1393, 64
        %v1423 = vpop.permute.xlu0 %1422
        %1424 = vrot.lane.b32.xlu0 %v1394, 64
        %v1425 = vpop.permute.xlu0 %1424
        %1426 = vrot.lane.b32.xlu0 %v1395, 64
        %v1427 = vpop.permute.xlu0 %1426
        %vm1428 = vcmask 523264
        %v1429 = vsel %vm1428, %v1417, %v1419
        %v1430 = vsel %vm1428, %v1419, %v1421
        %v1431 = vsel %vm1428, %v1423, %v1425
        %v1432 = vsel %vm1428, %v1425, %v1427
        %v1438 = vsel %vm710, %v1396, 0
        %v1441 = vsel %vm710, %v1397, 0
        %1443 = vmatprep.subr.mxu0 0.0
        %1444 = vmatpush1.msra.mxu0 0.0
        %1445 = vmatprep.subr.mxu0 0.0
        %1446 = vmatpush1.msra.mxu0 0.0
        %1447 = vmatprep.subr.mxu0 0.0
        %1448 = vmatpush1.msra.mxu0 0.0
        %1449 = vmatprep.subr.mxu0 0.0
        %1450 = vmatpush1.msra.mxu0 0.0
        %1451 = vmatprep.subr.mxu0 0.0
        %1452 = vmatpush1.msra.mxu0 0.0
        %1453 = vmatprep.subr.mxu0 0.0
        %1454 = vmatpush1.msra.mxu0 0.0
        %1455 = vmatprep.subr.mxu0 0.0
        %1456 = vmatpush1.msra.mxu0 0.0
        %1457 = vmatprep.subr.mxu0 0.0
        %1458 = vmatpush1.msra.mxu0 0.0
        %1459 = vmatprep.subr.mxu0 0.0
        %1460 = vmatpush1.msra.mxu0 0.0
        %1461 = vmatprep.subr.mxu0 0.0
        %1462 = vmatpush1.msra.mxu0 0.0
        %1463 = vmatprep.subr.mxu0 0.0
        %1464 = vmatpush1.msra.mxu0 0.0
        %1465 = vmatprep.subr.mxu0 0.0
        %1466 = vmatpush1.msra.mxu0 0.0
        %1467 = vmatprep.subr.mxu0 0.0
        %1468 = vmatpush1.msra.mxu0 0.0
        %1469 = vmatprep.subr.mxu0 0.0
        %1470 = vmatpush1.msra.mxu0 0.0
        %1471 = vmatprep.subr.mxu0 %v1432
        %1472 = vmatpush1.msra.mxu0 %v1431
        %1473 = vmatprep.subr.mxu0 %v1430
        %1474 = vmatpush1.msra.mxu0 %v1429
        %1475 = vmatprep.subr.mxu0 0.0
        %1476 = vmatpush2.msra.mxu0 0.0
        %1477 = vmatprep.subr.mxu0 0.0
        %1478 = vmatpush2.msra.mxu0 0.0
        %1479 = vmatprep.subr.mxu0 0.0
        %1480 = vmatpush2.msra.mxu0 0.0
        %1481 = vmatprep.subr.mxu0 0.0
        %1482 = vmatpush2.msra.mxu0 0.0
        %1483 = vmatprep.subr.mxu0 0.0
        %1484 = vmatpush2.msra.mxu0 0.0
        %1485 = vmatprep.subr.mxu0 0.0
        %1486 = vmatpush2.msra.mxu0 0.0
        %1487 = vmatprep.subr.mxu0 0.0
        %1488 = vmatpush2.msra.mxu0 0.0
        %1489 = vmatprep.subr.mxu0 0.0
        %1490 = vmatpush2.msra.mxu0 0.0
        %1491 = vmatprep.subr.mxu0 0.0
        %1492 = vmatpush2.msra.mxu0 0.0
        %1493 = vmatprep.subr.mxu0 0.0
        %1494 = vmatpush2.msra.mxu0 0.0
        %1495 = vmatprep.subr.mxu0 0.0
        %1496 = vmatpush2.msra.mxu0 0.0
        %1497 = vmatprep.subr.mxu0 0.0
        %1498 = vmatpush2.msra.mxu0 0.0
        %1499 = vmatprep.subr.mxu0 0.0
        %1500 = vmatpush2.msra.mxu0 0.0
        %1501 = vmatprep.subr.mxu0 0.0
        %1502 = vmatpush2.msra.mxu0 0.0
        %1503 = vmatprep.subr.mxu0 0.0
        %1504 = vmatpush2.msra.mxu0 0.0
        %1505 = vmatprep.subr.mxu0 0.0
        %1506 = vmatpush2.msra.mxu0 0.0
        %1507 = vmatprep.mubr.f32.mxu0 0.0
        %1508 = vmatmul.mubr.f32.gmra.mxu0 %v1438
        %v1509 = vpop.f32.mrf.mxu0
        %v1510 = vadd.f32 %v1403, %v1509
        %v1511 = vpop.f32.mrf.mxu0
        %v1512 = vadd.f32 %v1403, %v1511
        %1513 = vmatprep.mubr.f32.mxu0 0.0
        %1514 = vmatmul.mubr.f32.gmra.mxu0 %v1441
        %v1515 = vpop.f32.mrf.mxu0
        %v1516 = vadd.f32 %v1408, %v1515
        %v1517 = vpop.f32.mrf.mxu0
        %v1518 = vadd.f32 %v1408, %v1517
        %1519 = vdwg.mxu0
        %1520 = vst [vmem:[%s331] sm:$0xff] %v1510
        %1521 = vst [vmem:[%s331 + $0x8] sm:$0xff] %v1512
        %1522 = vst [vmem:[%s331 + $0x10] sm:$0xff] %v1516
        %1523 = vst [vmem:[%s331 + $0x18] sm:$0xff] %v1518
        %s1524 = sand.u32 %s221, 1
        %s1525 = sand.u32 %s221, 1
        %s1526 = smul.addr %s1525, 32
        %s1527 = scalar_lea.vmem [#allocation4], %s1526
        // Predicated region
        $region53: #{model_forward.1} parent=51 // pred_check
          %p1528 = pneg %p231
        $region54: #{model_forward.1} parent=51 // pred_check_branch
          %1530 = sbr.rel (%p1528) target = $region56
        $region55: #{model_forward.1} parent=51 // pred_region
          %s1531 = smul.u32 2, %s24
          %s1532 = smul.addr %s23, 16
          %s1533 = sadd.s32 %s1531, %s1532
          %s1534 = smul.addr %s1533, 8
          %s1535 = scalar_lea.vmem %s8, %s1534
          // Predicated region
          $region57: #{model_forward.1} parent=55 // pred_check
            _
          $region58: #{model_forward.1} parent=55 // pred_check_branch
            %1537 = sbr.rel (0) target = $region60
          $region59: #{model_forward.1} parent=55 // pred_region
            // Predicated region
            $region61: #{model_forward.1} parent=59 // pred_check
              _
            $region62: #{model_forward.1} parent=59 // pred_check_branch
              %1539 = sbr.rel (0) target = $region64
            $region63: #{model_forward.1} parent=59 // pred_region
              loop: start=0, step=1, limit=1
              $region65: #{model_forward.1} parent=63 // loop_pre_header
                _
              $region66: #{model_forward.1} parent=63 // loop_header
                %s1541 = sphi 0, %s1545
                %p1542 = scmp.ge.s32.totalorder %s1541, 1
                %s1546 = sphi %s1527, %s1527
                %s1547 = sphi %s1535, %s1535
              $region67: #{model_forward.1} parent=63 // loop_header_branch
                %1544 = sbr.rel (%p1542) target = $region71
              $region68: #{model_forward.1} parent=63 // loop_body
                %v1548 = vld [vmem:[%s1546] sm:$0xff]
                %1549 = vst [vmem:[%s1547] sm:$0xff] %v1548
                %v1550 = vld [vmem:[%s1546 + $0x8] sm:$0xff]
                %1551 = vst [vmem:[%s1547 + $0x8] sm:$0xff] %v1550
                %v1552 = vld [vmem:[%s1546 + $0x10] sm:$0xff]
                %1553 = vst [vmem:[%s1547 + $0x40] sm:$0xff] %v1552
                %v1554 = vld [vmem:[%s1546 + $0x18] sm:$0xff]
                %1555 = vst [vmem:[%s1547 + $0x48] sm:$0xff] %v1554
              $region69: #{model_forward.1} parent=63 // loop_footer
                %s1545 = sadd.s32 1, %s1541
              $region70: #{model_forward.1} parent=63 // loop_footer_branch
                %1540 = sbr.rel target = $region66
              $region71: #{model_forward.1} parent=63 // loop_exit
                _
            $region64: #{model_forward.1} parent=59 // pred_fallthru
              _
            // Predicated region
            $region72: #{model_forward.1} parent=59 // pred_check
              _
            $region73: #{model_forward.1} parent=59 // pred_check_branch
              %1557 = sbr.rel target = $region75
            $region74: #{model_forward.1} parent=59 // pred_region
              _
            $region75: #{model_forward.1} parent=59 // pred_fallthru
              _
          $region60: #{model_forward.1} parent=55 // pred_fallthru
            _
          %1558 = vnop
        $region56: #{model_forward.1} parent=51 // pred_fallthru
          _
      $region52: #{model_forward.1} parent=5 // pred_fallthru
        _
      %p1559 = scmp.le.s32.totalorder 2, %s14
      // Predicated region
      $region76: #{model_forward.1} parent=5 // pred_check
        %p1560 = pneg %p1559
      $region77: #{model_forward.1} parent=5 // pred_check_branch
        %1562 = sbr.rel (%p1560) target = $region79
      $region78: #{model_forward.1} parent=5 // pred_region
        %s1563 = ssub.s32 %s14, 2
        // Predicated region
        $region80: #{model_forward.1} parent=78 // pred_check
          %p1564 = pneg %p237
        $region81: #{model_forward.1} parent=78 // pred_check_branch
          %1566 = sbr.rel (%p1564) target = $region83
        $region82: #{model_forward.1} parent=78 // pred_region
          %s1567 = sand.u32 %s222, 1
          %s1568 = sand.u32 %s222, 1
          %s1569 = smul.addr %s1568, 32
          %s1570 = scalar_lea.vmem [#allocation4], %s1569
        $region83: #{model_forward.1} parent=78 // pred_fallthru
          _
      $region79: #{model_forward.1} parent=5 // pred_fallthru
        _
    $region6: #{model_forward.1} parent=1 // loop_footer
      %s18 = sadd.s32 1, %s14
    $region7: #{model_forward.1} parent=1 // loop_footer_branch
      %13 = sbr.rel target = $region3
    $region8: #{model_forward.1} parent=1 // loop_exit
      _

</llo_original>
